<compile_context>
chip_gen: v7x
topology: tpu7x:2x2x1
jax: 0.10.0
libtpu: 0.0.40
codegen_flags: <defaults>
</compile_context>

<pallas_src>
import jax
import jax.numpy as jnp
from jax import lax
from jax.experimental import pallas as pl
from jax.experimental.pallas import tpu as pltpu

_EPS = 1e-5  # nn.BatchNorm2d default eps


def _mod_const(v, c):
    """v % c for i32 vectors; bitwise-and fast path when c is a power of two."""
    if c & (c - 1) == 0:
        return jnp.bitwise_and(v, c - 1)
    return jnp.remainder(v, c)   # general (non power-of-two) fallback


def _bn_train_f32(h, gamma, beta):
    """Training-mode BatchNorm2d on flattened (M, C) activations, all f32.

    Centered two-pass (mean, then mean of squared deviations): numerically
    stable and matches PyTorch's batch-statistics normalization (biased
    variance, eps=1e-5).  Kept in f32 on the VPU (v5e has no bf16 VPU/EUP).
    """
    inv_m = 1.0 / float(h.shape[0])
    mu = jnp.sum(h, axis=0, keepdims=True) * inv_m
    d = h - mu
    var = jnp.sum(d * d, axis=0, keepdims=True) * inv_m
    return d * lax.rsqrt(var + _EPS) * gamma + beta


def bottleneck_kernel(x_ref, w1_ref, g1_ref, b1_ref,
                      w2_ref, g2_ref, b2_ref,
                      w3_ref, g3_ref, b3_ref,
                      o_ref):
    N, H, W, Cin = x_ref.shape
    width = w1_ref.shape[1]
    Cout = w3_ref.shape[1]
    M = N * H * W

    xv = x_ref[...].reshape(M, Cin)           # f32, reused for the identity add
    x_bf = xv.astype(jnp.bfloat16)

    # ---- conv1: 1x1 conv == channel matmul (bf16 MXU, f32 accumulate) ----
    h = jnp.dot(x_bf, w1_ref[...], preferred_element_type=jnp.float32)
    h = jnp.maximum(_bn_train_f32(h, g1_ref[...], b1_ref[...]), 0.0)
    h_bf = h.astype(jnp.bfloat16)

    # ---- conv2: 3x3, stride=1, pad=1 — scratch-free ----------------------
    # Nine shifted + masked K=width matmuls accumulated in f32.  The (dy, dx)
    # window shift on the flattened (M, width) activation is a sublane
    # rotation by dy*W+dx rows (pltpu.roll, XLU); out-of-bounds taps are
    # zeroed with iota-derived boundary masks (VPU).  XLU/VPU work overlaps
    # the MXU; the kernel is data-movement-bound, so small per-tap K is fine.
    idx = lax.broadcasted_iota(jnp.int32, (M, width), 0)   # flattened row id
    p_in_img = _mod_const(idx, H * W)                      # y*W + x within an image
    x_in_row = _mod_const(idx, W)                          # x within a row

    acc = jnp.dot(h_bf, w2_ref[4], preferred_element_type=jnp.float32)  # centre tap
    for k in range(9):
        if k == 4:
            continue
        dy, dx = k // 3 - 1, k % 3 - 1
        shift_rows = dy * W + dx
        # rolled[i] = h[i + shift_rows]  (jnp.roll semantics: out[i] = x[i - shift])
        rolled = pltpu.roll(h, shift=(-shift_rows) % M, axis=0)

        valid = None
        if dy == -1:
            valid = p_in_img >= W                  # y >= 1
        elif dy == 1:
            valid = p_in_img < (H - 1) * W         # y <= H-2
        if dx == -1:
            vx = x_in_row >= 1
            valid = vx if valid is None else jnp.logical_and(valid, vx)
        elif dx == 1:
            vx = x_in_row < (W - 1)
            valid = vx if valid is None else jnp.logical_and(valid, vx)

        win = jnp.where(valid, rolled, 0.0).astype(jnp.bfloat16)
        acc = acc + jnp.dot(win, w2_ref[k], preferred_element_type=jnp.float32)

    h = jnp.maximum(_bn_train_f32(acc, g2_ref[...], b2_ref[...]), 0.0)

    # ---- conv3: 1x1 conv == channel matmul ----
    h = jnp.dot(h.astype(jnp.bfloat16), w3_ref[...],
                preferred_element_type=jnp.float32)
    h = _bn_train_f32(h, g3_ref[...], b3_ref[...])

    # ---- residual add (downsample=None => identity, Cin == Cout) + relu ----
    out = jnp.maximum(h + xv, 0.0)
    o_ref[...] = out.reshape(N, H, W, Cout).astype(o_ref.dtype)   # lane-dense store


def _lane_pad(c):
    return ((c + 127) // 128) * 128


def bottleneck_forward_nhwc(x_nhwc, params):
    """Native NHWC path: x [N, H, W, Cin] float32 -> [N, H, W, Cout]."""
    w1, g1, b1, w2, g2, b2, w3, g3, b3 = params   # conv weights are already bf16
    N, H, W, Cin = x_nhwc.shape
    width = w1.shape[1]
    Cout = w3.shape[1]
    assert Cin == Cout, "identity add requires in_channel == out_channel * expansion"
    M = N * H * W

    flops = 2 * M * (Cin * width + 9 * width * width + width * Cout)
    bytes_accessed = ((x_nhwc.size + M * Cout) * 4
                      + (w1.size + w2.size + w3.size) * 2
                      + (g1.size + b1.size + g2.size + b2.size
                         + g3.size + b3.size) * 4)

    # VMEM budget: whole-array residency (no grid -- see TODO) plus live
    # f32/bf16 temporaries, accounting for lane padding to 128.
    act_bytes = M * _lane_pad(width) * 4
    vmem_need = (M * (_lane_pad(Cin) + _lane_pad(Cout)) * 4
                 + (_lane_pad(Cin) * width + 9 * width * _lane_pad(width)
                    + width * _lane_pad(Cout)) * 2
                 + 8 * act_bytes)
    try:   # per-generation clamp (v5e/v6e: 128 MiB physical, v7x: 64 MiB)
        cap = int(getattr(pltpu.get_tpu_info(), "vmem_capacity_bytes", 64 << 20))
    except Exception:
        cap = 64 << 20
    vmem_limit = int(min(max(vmem_need + (8 << 20), 32 << 20), (cap * 7) // 8))

    vmem = pl.BlockSpec(memory_space=pltpu.MemorySpace.VMEM)
    return pl.pallas_call(
        bottleneck_kernel,
        out_shape=jax.ShapeDtypeStruct((N, H, W, Cout), x_nhwc.dtype),
        in_specs=[vmem] * 10,
        out_specs=vmem,
        compiler_params=pltpu.CompilerParams(vmem_limit_bytes=vmem_limit),
        cost_estimate=pl.CostEstimate(flops=flops,
                                      transcendentals=2 * width + Cout,
                                      bytes_accessed=bytes_accessed),
    )(x_nhwc, w1, g1, b1, w2, g2, b2, w3, g3, b3)


def bottleneck_forward(x_nchw, params):
    """PyTorch-parity wrapper: x [N, Cin, H, W] -> [N, Cout, H, W]."""
    x_nhwc = jnp.transpose(x_nchw, (0, 2, 3, 1))
    y = bottleneck_forward_nhwc(x_nhwc, params)
    return jnp.transpose(y, (0, 3, 1, 2))


def init_params(key, in_channel, out_channel, groups=1, width_per_group=64):
    """Deterministic parameter init matching the module's shapes.

    PyTorch conv weight layouts converted to matmul-friendly layouts and cast
    to bf16 once (MXU inputs), so the forward pass has zero per-call casts:
      conv1 [width, Cin, 1, 1]   -> w1 [Cin, width]        (bf16)
      conv2 [width, width, 3, 3] -> w2 [9, width, width]   (bf16, k = kh*3+kw, [k, ci, co])
      conv3 [Cout, width, 1, 1]  -> w3 [width, Cout]       (bf16)
    BN gamma/beta use PyTorch defaults (ones / zeros), shape (1, C), f32.
    """
    expansion = 4
    width = int(out_channel * (width_per_group / 64.0)) * groups
    cout = out_channel * expansion
    k1, k2, k3 = jax.random.split(key, 3)

    w1_t = 0.05 * jax.random.normal(k1, (width, in_channel, 1, 1), jnp.float32)
    w2_t = 0.05 * jax.random.normal(k2, (width, width, 3, 3), jnp.float32)
    w3_t = 0.05 * jax.random.normal(k3, (cout, width, 1, 1), jnp.float32)

    w1 = jnp.transpose(w1_t[:, :, 0, 0], (1, 0)).astype(jnp.bfloat16)          # [Cin, width]
    w2 = (jnp.transpose(w2_t, (2, 3, 1, 0))                                     # [kh, kw, ci, co]
          .reshape(9, width, width).astype(jnp.bfloat16))                       # [k, ci, co]
    w3 = jnp.transpose(w3_t[:, :, 0, 0], (1, 0)).astype(jnp.bfloat16)          # [width, Cout]

    g1 = jnp.ones((1, width), jnp.float32); b1 = jnp.zeros((1, width), jnp.float32)
    g2 = jnp.ones((1, width), jnp.float32); b2 = jnp.zeros((1, width), jnp.float32)
    g3 = jnp.ones((1, cout), jnp.float32);  b3 = jnp.zeros((1, cout), jnp.float32)
    return (w1, g1, b1, w2, g2, b2, w3, g3, b3)


def _reference_nhwc(x, params):
    """Pure-JAX f32 reference (no Pallas) for a structural correctness check."""
    w1, g1, b1, w2, g2, b2, w3, g3, b3 = params
    width = w1.shape[1]

    def bn(h, g, b):
        mu = jnp.mean(h, axis=(0, 1, 2), keepdims=True)
        var = jnp.mean(jnp.square(h - mu), axis=(0, 1, 2), keepdims=True)
        return ((h - mu) * lax.rsqrt(var + _EPS) * g.reshape(1, 1, 1, -1)
                + b.reshape(1, 1, 1, -1))

    h = jnp.einsum("nhwc,cd->nhwd", x, w1.astype(jnp.float32))
    h = jax.nn.relu(bn(h, g1, b1))
    h = lax.conv_general_dilated(
        h, w2.astype(jnp.float32).reshape(3, 3, width, width),
        window_strides=(1, 1), padding=((1, 1), (1, 1)),
        dimension_numbers=("NHWC", "HWIO", "NHWC"))
    h = jax.nn.relu(bn(h, g2, b2))
    h = jnp.einsum("nhwc,cd->nhwd", h, w3.astype(jnp.float32))
    h = bn(h, g3, b3)
    return jax.nn.relu(h + x)


if __name__ == "__main__":
    # Small shapes consistent with the module: in_channel = out_channel * 4
    # so the identity (downsample=None) path is valid.
    N, H, W = 2, 8, 8
    out_channel = 32                      # width = 32
    in_channel = out_channel * 4          # 128 == Cout, lane-friendly

    key = jax.random.PRNGKey(0)
    kx, kp = jax.random.split(key)
    x_nhwc = jax.random.normal(kx, (N, H, W, in_channel), jnp.float32)
    params = init_params(kp, in_channel, out_channel)

    y = jax.jit(bottleneck_forward_nhwc)(x_nhwc, params)
    jax.block_until_ready(y)
    assert y.shape == (N, H, W, in_channel)
    assert bool(jnp.all(y >= 0.0))        # final ReLU

    # Structural check vs. pure-JAX f32 reference.  Tolerance is intentionally
    # loose: the kernel's matmuls run in bf16 on the MXU (f32 accumulate).
    y_ref = _reference_nhwc(x_nhwc, params)
    max_err = float(jnp.max(jnp.abs(y - y_ref)))
    assert max_err < 0.5, f"max abs err vs reference: {max_err}"
    print("KERNEL_OK")
</pallas_src>

<mosaic_0001>
module attributes {stable_mosaic.version = 11 : i64} {
  func.func @bottleneck_kernel(%arg0: memref<2x8x8x128xf32, #tpu.memory_space<vmem>>, %arg1: memref<128x32xbf16, #tpu.memory_space<vmem>>, %arg2: memref<1x32xf32, #tpu.memory_space<vmem>>, %arg3: memref<1x32xf32, #tpu.memory_space<vmem>>, %arg4: memref<9x32x32xbf16, #tpu.memory_space<vmem>>, %arg5: memref<1x32xf32, #tpu.memory_space<vmem>>, %arg6: memref<1x32xf32, #tpu.memory_space<vmem>>, %arg7: memref<32x128xbf16, #tpu.memory_space<vmem>>, %arg8: memref<1x128xf32, #tpu.memory_space<vmem>>, %arg9: memref<1x128xf32, #tpu.memory_space<vmem>>, %arg10: memref<2x8x8x128xf32, #tpu.memory_space<vmem>>) attributes {dimension_semantics = [], scalar_prefetch = 0 : i64, scratch_operands = 0 : i64, tpu.core_type = #tpu.core_type<tc>} {
    %c0 = arith.constant 0 : index
    %c0_0 = arith.constant 0 : index
    %c0_1 = arith.constant 0 : index
    %c0_2 = arith.constant 0 : index
    %0 = vector.load %arg0[%c0, %c0_0, %c0_1, %c0_2] : memref<2x8x8x128xf32, #tpu.memory_space<vmem>>, vector<2x8x8x128xf32>
    %1 = vector.shape_cast %0 : vector<2x8x8x128xf32> to vector<128x128xf32>
    %2 = arith.truncf %1 : vector<128x128xf32> to vector<128x128xbf16>
    %c0_3 = arith.constant 0 : index
    %c0_4 = arith.constant 0 : index
    %3 = vector.load %arg1[%c0_3, %c0_4] : memref<128x32xbf16, #tpu.memory_space<vmem>>, vector<128x32xbf16>
    %cst = arith.constant dense<0.000000e+00> : vector<128x32xf32>
    %4 = tpu.matmul %2, %3, %cst {dimension_numbers = #tpu.dot_dimension_numbers<[1], [0], [0], [1], [0, 0, 1, 1], [], []>} : vector<128x128xbf16>, vector<128x32xbf16>, vector<128x32xf32> -> vector<128x32xf32>
    %c0_5 = arith.constant 0 : index
    %c0_6 = arith.constant 0 : index
    %5 = vector.load %arg2[%c0_5, %c0_6] : memref<1x32xf32, #tpu.memory_space<vmem>>, vector<1x32xf32>
    %c0_7 = arith.constant 0 : index
    %c0_8 = arith.constant 0 : index
    %6 = vector.load %arg3[%c0_7, %c0_8] : memref<1x32xf32, #tpu.memory_space<vmem>>, vector<1x32xf32>
    %cst_9 = arith.constant dense<0.000000e+00> : vector<32xf32>
    %7 = vector.multi_reduction <add>, %4, %cst_9 [0] : vector<128x32xf32> to vector<32xf32>
    %8 = vector.shape_cast %7 : vector<32xf32> to vector<1x32xf32>
    %cst_10 = arith.constant 7.812500e-03 : f32
    %9 = vector.broadcast %cst_10 : f32 to vector<1x32xf32>
    %10 = arith.mulf %8, %9 : vector<1x32xf32>
    %11 = vector.broadcast %10 : vector<1x32xf32> to vector<128x32xf32>
    %12 = arith.subf %4, %11 : vector<128x32xf32>
    %13 = arith.mulf %12, %12 : vector<128x32xf32>
    %cst_11 = arith.constant dense<0.000000e+00> : vector<32xf32>
    %14 = vector.multi_reduction <add>, %13, %cst_11 [0] : vector<128x32xf32> to vector<32xf32>
    %15 = vector.shape_cast %14 : vector<32xf32> to vector<1x32xf32>
    %cst_12 = arith.constant 7.812500e-03 : f32
    %16 = vector.broadcast %cst_12 : f32 to vector<1x32xf32>
    %17 = arith.mulf %15, %16 : vector<1x32xf32>
    %cst_13 = arith.constant 9.99999974E-6 : f32
    %18 = vector.broadcast %cst_13 : f32 to vector<1x32xf32>
    %19 = arith.addf %17, %18 : vector<1x32xf32>
    %20 = math.rsqrt %19 : vector<1x32xf32>
    %21 = vector.broadcast %20 : vector<1x32xf32> to vector<128x32xf32>
    %22 = arith.mulf %12, %21 : vector<128x32xf32>
    %23 = vector.broadcast %5 : vector<1x32xf32> to vector<128x32xf32>
    %24 = arith.mulf %22, %23 : vector<128x32xf32>
    %25 = vector.broadcast %6 : vector<1x32xf32> to vector<128x32xf32>
    %26 = arith.addf %24, %25 : vector<128x32xf32>
    %cst_14 = arith.constant 0.000000e+00 : f32
    %27 = vector.broadcast %cst_14 : f32 to vector<128x32xf32>
    %28 = arith.maximumf %26, %27 : vector<128x32xf32>
    %29 = arith.truncf %28 : vector<128x32xf32> to vector<128x32xbf16>
    %30 = tpu.iota {dimensions = array<i32: 0>} : vector<128x32xi32>
    %c63_i32 = arith.constant 63 : i32
    %31 = vector.broadcast %c63_i32 : i32 to vector<128x32xi32>
    %32 = arith.andi %30, %31 : vector<128x32xi32>
    %c7_i32 = arith.constant 7 : i32
    %33 = vector.broadcast %c7_i32 : i32 to vector<128x32xi32>
    %34 = arith.andi %30, %33 : vector<128x32xi32>
    %c4 = arith.constant 4 : index
    %c0_15 = arith.constant 0 : index
    %c0_16 = arith.constant 0 : index
    %35 = vector.load %arg4[%c4, %c0_15, %c0_16] : memref<9x32x32xbf16, #tpu.memory_space<vmem>>, vector<1x32x32xbf16>
    %36 = vector.shape_cast %35 : vector<1x32x32xbf16> to vector<32x32xbf16>
    %cst_17 = arith.constant dense<0.000000e+00> : vector<128x32xf32>
    %37 = tpu.matmul %29, %36, %cst_17 {dimension_numbers = #tpu.dot_dimension_numbers<[1], [0], [0], [1], [0, 0, 1, 1], [], []>} : vector<128x32xbf16>, vector<32x32xbf16>, vector<128x32xf32> -> vector<128x32xf32>
    %c9_i32 = arith.constant 9 : i32
    %38 = tpu.dynamic_rotate %28 by %c9_i32 dim 0 : vector<128x32xf32>, i32 -> vector<128x32xf32>
    %c8_i32 = arith.constant 8 : i32
    %39 = vector.broadcast %c8_i32 : i32 to vector<128x32xi32>
    %40 = arith.cmpi sge, %32, %39 : vector<128x32xi32>
    %c1_i32 = arith.constant 1 : i32
    %41 = vector.broadcast %c1_i32 : i32 to vector<128x32xi32>
    %42 = arith.cmpi sge, %34, %41 : vector<128x32xi32>
    %43 = arith.andi %40, %42 : vector<128x32xi1>
    %cst_18 = arith.constant 0.000000e+00 : f32
    %44 = vector.broadcast %cst_18 : f32 to vector<128x32xf32>
    %45 = arith.select %43, %38, %44 : vector<128x32xi1>, vector<128x32xf32>
    %46 = arith.truncf %45 : vector<128x32xf32> to vector<128x32xbf16>
    %c0_19 = arith.constant 0 : index
    %c0_20 = arith.constant 0 : index
    %c0_21 = arith.constant 0 : index
    %47 = vector.load %arg4[%c0_19, %c0_20, %c0_21] : memref<9x32x32xbf16, #tpu.memory_space<vmem>>, vector<1x32x32xbf16>
    %48 = vector.shape_cast %47 : vector<1x32x32xbf16> to vector<32x32xbf16>
    %cst_22 = arith.constant dense<0.000000e+00> : vector<128x32xf32>
    %49 = tpu.matmul %46, %48, %cst_22 {dimension_numbers = #tpu.dot_dimension_numbers<[1], [0], [0], [1], [0, 0, 1, 1], [], []>} : vector<128x32xbf16>, vector<32x32xbf16>, vector<128x32xf32> -> vector<128x32xf32>
    %50 = arith.addf %37, %49 : vector<128x32xf32>
    %c8_i32_23 = arith.constant 8 : i32
    %51 = tpu.dynamic_rotate %28 by %c8_i32_23 dim 0 : vector<128x32xf32>, i32 -> vector<128x32xf32>
    %c8_i32_24 = arith.constant 8 : i32
    %52 = vector.broadcast %c8_i32_24 : i32 to vector<128x32xi32>
    %53 = arith.cmpi sge, %32, %52 : vector<128x32xi32>
    %cst_25 = arith.constant 0.000000e+00 : f32
    %54 = vector.broadcast %cst_25 : f32 to vector<128x32xf32>
    %55 = arith.select %53, %51, %54 : vector<128x32xi1>, vector<128x32xf32>
    %56 = arith.truncf %55 : vector<128x32xf32> to vector<128x32xbf16>
    %c1 = arith.constant 1 : index
    %c0_26 = arith.constant 0 : index
    %c0_27 = arith.constant 0 : index
    %57 = vector.load %arg4[%c1, %c0_26, %c0_27] : memref<9x32x32xbf16, #tpu.memory_space<vmem>>, vector<1x32x32xbf16>
    %58 = vector.shape_cast %57 : vector<1x32x32xbf16> to vector<32x32xbf16>
    %cst_28 = arith.constant dense<0.000000e+00> : vector<128x32xf32>
    %59 = tpu.matmul %56, %58, %cst_28 {dimension_numbers = #tpu.dot_dimension_numbers<[1], [0], [0], [1], [0, 0, 1, 1], [], []>} : vector<128x32xbf16>, vector<32x32xbf16>, vector<128x32xf32> -> vector<128x32xf32>
    %60 = arith.addf %50, %59 : vector<128x32xf32>
    %c7_i32_29 = arith.constant 7 : i32
    %61 = tpu.dynamic_rotate %28 by %c7_i32_29 dim 0 : vector<128x32xf32>, i32 -> vector<128x32xf32>
    %c8_i32_30 = arith.constant 8 : i32
    %62 = vector.broadcast %c8_i32_30 : i32 to vector<128x32xi32>
    %63 = arith.cmpi sge, %32, %62 : vector<128x32xi32>
    %c7_i32_31 = arith.constant 7 : i32
    %64 = vector.broadcast %c7_i32_31 : i32 to vector<128x32xi32>
    %65 = arith.cmpi slt, %34, %64 : vector<128x32xi32>
    %66 = arith.andi %63, %65 : vector<128x32xi1>
    %cst_32 = arith.constant 0.000000e+00 : f32
    %67 = vector.broadcast %cst_32 : f32 to vector<128x32xf32>
    %68 = arith.select %66, %61, %67 : vector<128x32xi1>, vector<128x32xf32>
    %69 = arith.truncf %68 : vector<128x32xf32> to vector<128x32xbf16>
    %c2 = arith.constant 2 : index
    %c0_33 = arith.constant 0 : index
    %c0_34 = arith.constant 0 : index
    %70 = vector.load %arg4[%c2, %c0_33, %c0_34] : memref<9x32x32xbf16, #tpu.memory_space<vmem>>, vector<1x32x32xbf16>
    %71 = vector.shape_cast %70 : vector<1x32x32xbf16> to vector<32x32xbf16>
    %cst_35 = arith.constant dense<0.000000e+00> : vector<128x32xf32>
    %72 = tpu.matmul %69, %71, %cst_35 {dimension_numbers = #tpu.dot_dimension_numbers<[1], [0], [0], [1], [0, 0, 1, 1], [], []>} : vector<128x32xbf16>, vector<32x32xbf16>, vector<128x32xf32> -> vector<128x32xf32>
    %73 = arith.addf %60, %72 : vector<128x32xf32>
    %c1_i32_36 = arith.constant 1 : i32
    %74 = tpu.dynamic_rotate %28 by %c1_i32_36 dim 0 : vector<128x32xf32>, i32 -> vector<128x32xf32>
    %c1_i32_37 = arith.constant 1 : i32
    %75 = vector.broadcast %c1_i32_37 : i32 to vector<128x32xi32>
    %76 = arith.cmpi sge, %34, %75 : vector<128x32xi32>
    %cst_38 = arith.constant 0.000000e+00 : f32
    %77 = vector.broadcast %cst_38 : f32 to vector<128x32xf32>
    %78 = arith.select %76, %74, %77 : vector<128x32xi1>, vector<128x32xf32>
    %79 = arith.truncf %78 : vector<128x32xf32> to vector<128x32xbf16>
    %c3 = arith.constant 3 : index
    %c0_39 = arith.constant 0 : index
    %c0_40 = arith.constant 0 : index
    %80 = vector.load %arg4[%c3, %c0_39, %c0_40] : memref<9x32x32xbf16, #tpu.memory_space<vmem>>, vector<1x32x32xbf16>
    %81 = vector.shape_cast %80 : vector<1x32x32xbf16> to vector<32x32xbf16>
    %cst_41 = arith.constant dense<0.000000e+00> : vector<128x32xf32>
    %82 = tpu.matmul %79, %81, %cst_41 {dimension_numbers = #tpu.dot_dimension_numbers<[1], [0], [0], [1], [0, 0, 1, 1], [], []>} : vector<128x32xbf16>, vector<32x32xbf16>, vector<128x32xf32> -> vector<128x32xf32>
    %83 = arith.addf %73, %82 : vector<128x32xf32>
    %c127_i32 = arith.constant 127 : i32
    %84 = tpu.dynamic_rotate %28 by %c127_i32 dim 0 : vector<128x32xf32>, i32 -> vector<128x32xf32>
    %c7_i32_42 = arith.constant 7 : i32
    %85 = vector.broadcast %c7_i32_42 : i32 to vector<128x32xi32>
    %86 = arith.cmpi slt, %34, %85 : vector<128x32xi32>
    %cst_43 = arith.constant 0.000000e+00 : f32
    %87 = vector.broadcast %cst_43 : f32 to vector<128x32xf32>
    %88 = arith.select %86, %84, %87 : vector<128x32xi1>, vector<128x32xf32>
    %89 = arith.truncf %88 : vector<128x32xf32> to vector<128x32xbf16>
    %c5 = arith.constant 5 : index
    %c0_44 = arith.constant 0 : index
    %c0_45 = arith.constant 0 : index
    %90 = vector.load %arg4[%c5, %c0_44, %c0_45] : memref<9x32x32xbf16, #tpu.memory_space<vmem>>, vector<1x32x32xbf16>
    %91 = vector.shape_cast %90 : vector<1x32x32xbf16> to vector<32x32xbf16>
    %cst_46 = arith.constant dense<0.000000e+00> : vector<128x32xf32>
    %92 = tpu.matmul %89, %91, %cst_46 {dimension_numbers = #tpu.dot_dimension_numbers<[1], [0], [0], [1], [0, 0, 1, 1], [], []>} : vector<128x32xbf16>, vector<32x32xbf16>, vector<128x32xf32> -> vector<128x32xf32>
    %93 = arith.addf %83, %92 : vector<128x32xf32>
    %c121_i32 = arith.constant 121 : i32
    %94 = tpu.dynamic_rotate %28 by %c121_i32 dim 0 : vector<128x32xf32>, i32 -> vector<128x32xf32>
    %c56_i32 = arith.constant 56 : i32
    %95 = vector.broadcast %c56_i32 : i32 to vector<128x32xi32>
    %96 = arith.cmpi slt, %32, %95 : vector<128x32xi32>
    %c1_i32_47 = arith.constant 1 : i32
    %97 = vector.broadcast %c1_i32_47 : i32 to vector<128x32xi32>
    %98 = arith.cmpi sge, %34, %97 : vector<128x32xi32>
    %99 = arith.andi %96, %98 : vector<128x32xi1>
    %cst_48 = arith.constant 0.000000e+00 : f32
    %100 = vector.broadcast %cst_48 : f32 to vector<128x32xf32>
    %101 = arith.select %99, %94, %100 : vector<128x32xi1>, vector<128x32xf32>
    %102 = arith.truncf %101 : vector<128x32xf32> to vector<128x32xbf16>
    %c6 = arith.constant 6 : index
    %c0_49 = arith.constant 0 : index
    %c0_50 = arith.constant 0 : index
    %103 = vector.load %arg4[%c6, %c0_49, %c0_50] : memref<9x32x32xbf16, #tpu.memory_space<vmem>>, vector<1x32x32xbf16>
    %104 = vector.shape_cast %103 : vector<1x32x32xbf16> to vector<32x32xbf16>
    %cst_51 = arith.constant dense<0.000000e+00> : vector<128x32xf32>
    %105 = tpu.matmul %102, %104, %cst_51 {dimension_numbers = #tpu.dot_dimension_numbers<[1], [0], [0], [1], [0, 0, 1, 1], [], []>} : vector<128x32xbf16>, vector<32x32xbf16>, vector<128x32xf32> -> vector<128x32xf32>
    %106 = arith.addf %93, %105 : vector<128x32xf32>
    %c120_i32 = arith.constant 120 : i32
    %107 = tpu.dynamic_rotate %28 by %c120_i32 dim 0 : vector<128x32xf32>, i32 -> vector<128x32xf32>
    %c56_i32_52 = arith.constant 56 : i32
    %108 = vector.broadcast %c56_i32_52 : i32 to vector<128x32xi32>
    %109 = arith.cmpi slt, %32, %108 : vector<128x32xi32>
    %cst_53 = arith.constant 0.000000e+00 : f32
    %110 = vector.broadcast %cst_53 : f32 to vector<128x32xf32>
    %111 = arith.select %109, %107, %110 : vector<128x32xi1>, vector<128x32xf32>
    %112 = arith.truncf %111 : vector<128x32xf32> to vector<128x32xbf16>
    %c7 = arith.constant 7 : index
    %c0_54 = arith.constant 0 : index
    %c0_55 = arith.constant 0 : index
    %113 = vector.load %arg4[%c7, %c0_54, %c0_55] : memref<9x32x32xbf16, #tpu.memory_space<vmem>>, vector<1x32x32xbf16>
    %114 = vector.shape_cast %113 : vector<1x32x32xbf16> to vector<32x32xbf16>
    %cst_56 = arith.constant dense<0.000000e+00> : vector<128x32xf32>
    %115 = tpu.matmul %112, %114, %cst_56 {dimension_numbers = #tpu.dot_dimension_numbers<[1], [0], [0], [1], [0, 0, 1, 1], [], []>} : vector<128x32xbf16>, vector<32x32xbf16>, vector<128x32xf32> -> vector<128x32xf32>
    %116 = arith.addf %106, %115 : vector<128x32xf32>
    %c119_i32 = arith.constant 119 : i32
    %117 = tpu.dynamic_rotate %28 by %c119_i32 dim 0 : vector<128x32xf32>, i32 -> vector<128x32xf32>
    %c56_i32_57 = arith.constant 56 : i32
    %118 = vector.broadcast %c56_i32_57 : i32 to vector<128x32xi32>
    %119 = arith.cmpi slt, %32, %118 : vector<128x32xi32>
    %c7_i32_58 = arith.constant 7 : i32
    %120 = vector.broadcast %c7_i32_58 : i32 to vector<128x32xi32>
    %121 = arith.cmpi slt, %34, %120 : vector<128x32xi32>
    %122 = arith.andi %119, %121 : vector<128x32xi1>
    %cst_59 = arith.constant 0.000000e+00 : f32
    %123 = vector.broadcast %cst_59 : f32 to vector<128x32xf32>
    %124 = arith.select %122, %117, %123 : vector<128x32xi1>, vector<128x32xf32>
    %125 = arith.truncf %124 : vector<128x32xf32> to vector<128x32xbf16>
    %c8 = arith.constant 8 : index
    %c0_60 = arith.constant 0 : index
    %c0_61 = arith.constant 0 : index
    %126 = vector.load %arg4[%c8, %c0_60, %c0_61] : memref<9x32x32xbf16, #tpu.memory_space<vmem>>, vector<1x32x32xbf16>
    %127 = vector.shape_cast %126 : vector<1x32x32xbf16> to vector<32x32xbf16>
    %cst_62 = arith.constant dense<0.000000e+00> : vector<128x32xf32>
    %128 = tpu.matmul %125, %127, %cst_62 {dimension_numbers = #tpu.dot_dimension_numbers<[1], [0], [0], [1], [0, 0, 1, 1], [], []>} : vector<128x32xbf16>, vector<32x32xbf16>, vector<128x32xf32> -> vector<128x32xf32>
    %129 = arith.addf %116, %128 : vector<128x32xf32>
    %c0_63 = arith.constant 0 : index
    %c0_64 = arith.constant 0 : index
    %130 = vector.load %arg5[%c0_63, %c0_64] : memref<1x32xf32, #tpu.memory_space<vmem>>, vector<1x32xf32>
    %c0_65 = arith.constant 0 : index
    %c0_66 = arith.constant 0 : index
    %131 = vector.load %arg6[%c0_65, %c0_66] : memref<1x32xf32, #tpu.memory_space<vmem>>, vector<1x32xf32>
    %cst_67 = arith.constant dense<0.000000e+00> : vector<32xf32>
    %132 = vector.multi_reduction <add>, %129, %cst_67 [0] : vector<128x32xf32> to vector<32xf32>
    %133 = vector.shape_cast %132 : vector<32xf32> to vector<1x32xf32>
    %cst_68 = arith.constant 7.812500e-03 : f32
    %134 = vector.broadcast %cst_68 : f32 to vector<1x32xf32>
    %135 = arith.mulf %133, %134 : vector<1x32xf32>
    %136 = vector.broadcast %135 : vector<1x32xf32> to vector<128x32xf32>
    %137 = arith.subf %129, %136 : vector<128x32xf32>
    %138 = arith.mulf %137, %137 : vector<128x32xf32>
    %cst_69 = arith.constant dense<0.000000e+00> : vector<32xf32>
    %139 = vector.multi_reduction <add>, %138, %cst_69 [0] : vector<128x32xf32> to vector<32xf32>
    %140 = vector.shape_cast %139 : vector<32xf32> to vector<1x32xf32>
    %cst_70 = arith.constant 7.812500e-03 : f32
    %141 = vector.broadcast %cst_70 : f32 to vector<1x32xf32>
    %142 = arith.mulf %140, %141 : vector<1x32xf32>
    %cst_71 = arith.constant 9.99999974E-6 : f32
    %143 = vector.broadcast %cst_71 : f32 to vector<1x32xf32>
    %144 = arith.addf %142, %143 : vector<1x32xf32>
    %145 = math.rsqrt %144 : vector<1x32xf32>
    %146 = vector.broadcast %145 : vector<1x32xf32> to vector<128x32xf32>
    %147 = arith.mulf %137, %146 : vector<128x32xf32>
    %148 = vector.broadcast %130 : vector<1x32xf32> to vector<128x32xf32>
    %149 = arith.mulf %147, %148 : vector<128x32xf32>
    %150 = vector.broadcast %131 : vector<1x32xf32> to vector<128x32xf32>
    %151 = arith.addf %149, %150 : vector<128x32xf32>
    %cst_72 = arith.constant 0.000000e+00 : f32
    %152 = vector.broadcast %cst_72 : f32 to vector<128x32xf32>
    %153 = arith.maximumf %151, %152 : vector<128x32xf32>
    %154 = arith.truncf %153 : vector<128x32xf32> to vector<128x32xbf16>
    %c0_73 = arith.constant 0 : index
    %c0_74 = arith.constant 0 : index
    %155 = vector.load %arg7[%c0_73, %c0_74] : memref<32x128xbf16, #tpu.memory_space<vmem>>, vector<32x128xbf16>
    %cst_75 = arith.constant dense<0.000000e+00> : vector<128x128xf32>
    %156 = tpu.matmul %154, %155, %cst_75 {dimension_numbers = #tpu.dot_dimension_numbers<[1], [0], [0], [1], [0, 0, 1, 1], [], []>} : vector<128x32xbf16>, vector<32x128xbf16>, vector<128x128xf32> -> vector<128x128xf32>
    %c0_76 = arith.constant 0 : index
    %c0_77 = arith.constant 0 : index
    %157 = vector.load %arg8[%c0_76, %c0_77] : memref<1x128xf32, #tpu.memory_space<vmem>>, vector<1x128xf32>
    %c0_78 = arith.constant 0 : index
    %c0_79 = arith.constant 0 : index
    %158 = vector.load %arg9[%c0_78, %c0_79] : memref<1x128xf32, #tpu.memory_space<vmem>>, vector<1x128xf32>
    %cst_80 = arith.constant dense<0.000000e+00> : vector<128xf32>
    %159 = vector.multi_reduction <add>, %156, %cst_80 [0] : vector<128x128xf32> to vector<128xf32>
    %160 = vector.shape_cast %159 : vector<128xf32> to vector<1x128xf32>
    %cst_81 = arith.constant 7.812500e-03 : f32
    %161 = vector.broadcast %cst_81 : f32 to vector<1x128xf32>
    %162 = arith.mulf %160, %161 : vector<1x128xf32>
    %163 = vector.broadcast %162 : vector<1x128xf32> to vector<128x128xf32>
    %164 = arith.subf %156, %163 : vector<128x128xf32>
    %165 = arith.mulf %164, %164 : vector<128x128xf32>
    %cst_82 = arith.constant dense<0.000000e+00> : vector<128xf32>
    %166 = vector.multi_reduction <add>, %165, %cst_82 [0] : vector<128x128xf32> to vector<128xf32>
    %167 = vector.shape_cast %166 : vector<128xf32> to vector<1x128xf32>
    %cst_83 = arith.constant 7.812500e-03 : f32
    %168 = vector.broadcast %cst_83 : f32 to vector<1x128xf32>
    %169 = arith.mulf %167, %168 : vector<1x128xf32>
    %cst_84 = arith.constant 9.99999974E-6 : f32
    %170 = vector.broadcast %cst_84 : f32 to vector<1x128xf32>
    %171 = arith.addf %169, %170 : vector<1x128xf32>
    %172 = math.rsqrt %171 : vector<1x128xf32>
    %173 = vector.broadcast %172 : vector<1x128xf32> to vector<128x128xf32>
    %174 = arith.mulf %164, %173 : vector<128x128xf32>
    %175 = vector.broadcast %157 : vector<1x128xf32> to vector<128x128xf32>
    %176 = arith.mulf %174, %175 : vector<128x128xf32>
    %177 = vector.broadcast %158 : vector<1x128xf32> to vector<128x128xf32>
    %178 = arith.addf %176, %177 : vector<128x128xf32>
    %179 = arith.addf %178, %1 : vector<128x128xf32>
    %cst_85 = arith.constant 0.000000e+00 : f32
    %180 = vector.broadcast %cst_85 : f32 to vector<128x128xf32>
    %181 = arith.maximumf %179, %180 : vector<128x128xf32>
    %182 = vector.shape_cast %181 : vector<128x128xf32> to vector<2x8x8x128xf32>
    %c0_86 = arith.constant 0 : index
    %c0_87 = arith.constant 0 : index
    %c0_88 = arith.constant 0 : index
    %c0_89 = arith.constant 0 : index
    %183 = vector.load %arg10[%c0_86, %c0_87, %c0_88, %c0_89] : memref<2x8x8x128xf32, #tpu.memory_space<vmem>>, vector<2x8x8x128xf32>
    tpu.vector_store %arg10[%c0_86, %c0_87, %c0_88, %c0_89], %182 {strides = array<i32>} : memref<2x8x8x128xf32, #tpu.memory_space<vmem>>, vector<2x8x8x128xf32>,
    return
  }
}

</mosaic_0001>

<llo_original>
// kernel: bottleneck_forward_nhwc.1
$region0: #{bottleneck_forward_nhwc.1}
  #allocation0 [shape = 'u32[]', space=smem, size = 0x4, offset = 0x4, fixed_abs, tag = 'smem constant byte address 0x4 - core index']
  #allocation1 [shape = 'u32[144,128]{1,0:T(1,128)}', space=vmem, size = 0x12000, scoped, tag = 'internal scratch']
  %s0 = inlined_call_operand.hbm [shape: f32[2,8,8,128], index: 0, kind: input, shape index: {}]
  %s1 = inlined_call_operand.vmem [shape: bf16[128,32], index: 1, kind: input, shape index: {}]
  %s2 = inlined_call_operand.vmem [shape: f32[1,32], index: 2, kind: input, shape index: {}]
  %s3 = inlined_call_operand.vmem [shape: f32[1,32], index: 3, kind: input, shape index: {}]
  %s4 = inlined_call_operand.hbm [shape: bf16[9,32,32], index: 4, kind: input, shape index: {}]
  %s5 = inlined_call_operand.vmem [shape: f32[1,32], index: 5, kind: input, shape index: {}]
  %s6 = inlined_call_operand.vmem [shape: f32[1,32], index: 6, kind: input, shape index: {}]
  %s7 = inlined_call_operand.vmem [shape: bf16[32,128], index: 7, kind: input, shape index: {}]
  %s8 = inlined_call_operand.vmem [shape: f32[1,128], index: 8, kind: input, shape index: {}]
  %s9 = inlined_call_operand.vmem [shape: f32[1,128], index: 9, kind: input, shape index: {}]
  %s10 = inlined_call_operand.hbm [shape: f32[2,8,8,128], index: 10, kind: output, shape index: {}]
  %s11 = sld [smem:[#allocation0]]
  $region58: #{bottleneck_forward_nhwc.1} parent=0
    _
  %s13 = ssub.s32 1, %s11
  %s14 = scalar_select 0, %s13, %s11
  $region1: #{bottleneck_forward_nhwc.1} parent=0
    #allocation2 [shape = 'u8[65536]{0}', space=vmem, size = 0x10000, scoped, tag = 'input window, operand 0, single buffered']
    #allocation3 [shape = 's32[1]{0}', space=sflag, size = 0x4, scoped, tag = 'scoped memory for bottleneck_forward_nhwc.1']
    #allocation4 [shape = 's32[1]{0}', space=sflag, size = 0x4, scoped, tag = 'scoped memory for bottleneck_forward_nhwc.1']
    #allocation5 [shape = 'u8[73728]{0}', space=vmem, size = 0x12000, scoped, tag = 'input window, operand 4, single buffered']
    #allocation6 [shape = 's32[1]{0}', space=sflag, size = 0x4, scoped, tag = 'scoped memory for bottleneck_forward_nhwc.1']
    #allocation7 [shape = 'u8[65536]{0}', space=vmem, size = 0x10000, scoped, tag = 'output window, operand 0, single buffered']
    %15 = vsyncpa [#allocation3], 0
    %16 = vsyncpa [#allocation6], 0
    %17 = vsyncpa [#allocation4], 0
    // Predicated region
    $region2: #{bottleneck_forward_nhwc.1} parent=1 // pred_check
      _
    $region3: #{bottleneck_forward_nhwc.1} parent=1 // pred_check_branch
      %19 = sbr.rel (0) target = $region5
    $region4: #{bottleneck_forward_nhwc.1} parent=1 // pred_region
      %s21 = ssub.s32 2048, 2048
      %22 = vsyncadd [#allocation3], %s21
      %s23 = sshll.u32 [#allocation2], 4
      %s24 = int_to_ptr.vmem [resolvable:$true] %s23
      %29 = dma.hbm_to_vmem [thread:$0]  %s0, 2048, %s24, [#allocation3], 128, 128, 8
    $region5: #{bottleneck_forward_nhwc.1} parent=1 // pred_fallthru
      _
    // Predicated region
    $region6: #{bottleneck_forward_nhwc.1} parent=1 // pred_check
      _
    $region7: #{bottleneck_forward_nhwc.1} parent=1 // pred_check_branch
      %31 = sbr.rel (0) target = $region9
    $region8: #{bottleneck_forward_nhwc.1} parent=1 // pred_region
      _
    $region9: #{bottleneck_forward_nhwc.1} parent=1 // pred_fallthru
      _
    // Predicated region
    $region10: #{bottleneck_forward_nhwc.1} parent=1 // pred_check
      _
    $region11: #{bottleneck_forward_nhwc.1} parent=1 // pred_check_branch
      %33 = sbr.rel (0) target = $region13
    $region12: #{bottleneck_forward_nhwc.1} parent=1 // pred_region
      _
    $region13: #{bottleneck_forward_nhwc.1} parent=1 // pred_fallthru
      _
    // Predicated region
    $region14: #{bottleneck_forward_nhwc.1} parent=1 // pred_check
      _
    $region15: #{bottleneck_forward_nhwc.1} parent=1 // pred_check_branch
      %35 = sbr.rel (0) target = $region17
    $region16: #{bottleneck_forward_nhwc.1} parent=1 // pred_region
      _
    $region17: #{bottleneck_forward_nhwc.1} parent=1 // pred_fallthru
      _
    // Predicated region
    $region18: #{bottleneck_forward_nhwc.1} parent=1 // pred_check
      _
    $region19: #{bottleneck_forward_nhwc.1} parent=1 // pred_check_branch
      %37 = sbr.rel (0) target = $region21
    $region20: #{bottleneck_forward_nhwc.1} parent=1 // pred_region
      %s39 = ssub.s32 2304, 2304
      %40 = vsyncadd [#allocation6], %s39
      %s41 = sshll.u32 [#allocation5], 4
      %s42 = int_to_ptr.vmem [resolvable:$true] %s41
      %47 = dma.hbm_to_vmem [thread:$0]  %s4, 2304, %s42, [#allocation6], 64, 64, 4
    $region21: #{bottleneck_forward_nhwc.1} parent=1 // pred_fallthru
      _
    // Predicated region
    $region22: #{bottleneck_forward_nhwc.1} parent=1 // pred_check
      _
    $region23: #{bottleneck_forward_nhwc.1} parent=1 // pred_check_branch
      %49 = sbr.rel (0) target = $region25
    $region24: #{bottleneck_forward_nhwc.1} parent=1 // pred_region
      _
    $region25: #{bottleneck_forward_nhwc.1} parent=1 // pred_fallthru
      _
    // Predicated region
    $region26: #{bottleneck_forward_nhwc.1} parent=1 // pred_check
      _
    $region27: #{bottleneck_forward_nhwc.1} parent=1 // pred_check_branch
      %51 = sbr.rel (0) target = $region29
    $region28: #{bottleneck_forward_nhwc.1} parent=1 // pred_region
      _
    $region29: #{bottleneck_forward_nhwc.1} parent=1 // pred_fallthru
      _
    // Predicated region
    $region30: #{bottleneck_forward_nhwc.1} parent=1 // pred_check
      _
    $region31: #{bottleneck_forward_nhwc.1} parent=1 // pred_check_branch
      %53 = sbr.rel (0) target = $region33
    $region32: #{bottleneck_forward_nhwc.1} parent=1 // pred_region
      _
    $region33: #{bottleneck_forward_nhwc.1} parent=1 // pred_fallthru
      _
    // Predicated region
    $region34: #{bottleneck_forward_nhwc.1} parent=1 // pred_check
      _
    $region35: #{bottleneck_forward_nhwc.1} parent=1 // pred_check_branch
      %55 = sbr.rel (0) target = $region37
    $region36: #{bottleneck_forward_nhwc.1} parent=1 // pred_region
      _
    $region37: #{bottleneck_forward_nhwc.1} parent=1 // pred_fallthru
      _
    // Predicated region
    $region38: #{bottleneck_forward_nhwc.1} parent=1 // pred_check
      _
    $region39: #{bottleneck_forward_nhwc.1} parent=1 // pred_check_branch
      %57 = sbr.rel (0) target = $region41
    $region40: #{bottleneck_forward_nhwc.1} parent=1 // pred_region
      _
    $region41: #{bottleneck_forward_nhwc.1} parent=1 // pred_fallthru
      _
    // Predicated region
    $region42: #{bottleneck_forward_nhwc.1} parent=1 // pred_check
      _
    $region43: #{bottleneck_forward_nhwc.1} parent=1 // pred_check_branch
      %59 = sbr.rel (0) target = $region45
    $region44: #{bottleneck_forward_nhwc.1} parent=1 // pred_region
      %60 = dma.done [#allocation3], 2048
    $region45: #{bottleneck_forward_nhwc.1} parent=1 // pred_fallthru
      _
    // Predicated region
    $region46: #{bottleneck_forward_nhwc.1} parent=1 // pred_check
      _
    $region47: #{bottleneck_forward_nhwc.1} parent=1 // pred_check_branch
      %62 = sbr.rel (0) target = $region49
    $region48: #{bottleneck_forward_nhwc.1} parent=1 // pred_region
      %63 = dma.done [#allocation6], 2304
    $region49: #{bottleneck_forward_nhwc.1} parent=1 // pred_fallthru
      _
    %v65 = vld [vmem:[#allocation2] sm:$0xff]
    %v66 = vld [vmem:[#allocation2 + $0x8] sm:$0xff]
    %v67 = vld [vmem:[#allocation2 + $0x10] sm:$0xff]
    %v68 = vld [vmem:[#allocation2 + $0x18] sm:$0xff]
    %v69 = vld [vmem:[#allocation2 + $0x20] sm:$0xff]
    %v70 = vld [vmem:[#allocation2 + $0x28] sm:$0xff]
    %v71 = vld [vmem:[#allocation2 + $0x30] sm:$0xff]
    %v72 = vld [vmem:[#allocation2 + $0x38] sm:$0xff]
    %v73 = vld [vmem:[#allocation2 + $0x40] sm:$0xff]
    %v74 = vld [vmem:[#allocation2 + $0x48] sm:$0xff]
    %v75 = vld [vmem:[#allocation2 + $0x50] sm:$0xff]
    %v76 = vld [vmem:[#allocation2 + $0x58] sm:$0xff]
    %v77 = vld [vmem:[#allocation2 + $0x60] sm:$0xff]
    %v78 = vld [vmem:[#allocation2 + $0x68] sm:$0xff]
    %v79 = vld [vmem:[#allocation2 + $0x70] sm:$0xff]
    %v80 = vld [vmem:[#allocation2 + $0x78] sm:$0xff]
    %v81 = vpack.c.bf16 %v66, %v65
    %v82 = vpack.c.bf16 %v68, %v67
    %v83 = vpack.c.bf16 %v70, %v69
    %v84 = vpack.c.bf16 %v72, %v71
    %v85 = vpack.c.bf16 %v74, %v73
    %v86 = vpack.c.bf16 %v76, %v75
    %v87 = vpack.c.bf16 %v78, %v77
    %v88 = vpack.c.bf16 %v80, %v79
    %v89 = vld [vmem:[%s1] sm:$0xf]
    %v90 = vld [vmem:[%s1 + $0x4] sm:$0xf]
    %v91 = vld [vmem:[%s1 + $0x8] sm:$0xf]
    %v92 = vld [vmem:[%s1 + $0xc] sm:$0xf]
    %v93 = vld [vmem:[%s1 + $0x10] sm:$0xf]
    %v94 = vld [vmem:[%s1 + $0x14] sm:$0xf]
    %v95 = vld [vmem:[%s1 + $0x18] sm:$0xf]
    %v96 = vld [vmem:[%s1 + $0x1c] sm:$0xf]
    %v97 = vld [vmem:[%s1 + $0x20] sm:$0xf]
    %v98 = vld [vmem:[%s1 + $0x24] sm:$0xf]
    %v99 = vld [vmem:[%s1 + $0x28] sm:$0xf]
    %v100 = vld [vmem:[%s1 + $0x2c] sm:$0xf]
    %v101 = vld [vmem:[%s1 + $0x30] sm:$0xf]
    %v102 = vld [vmem:[%s1 + $0x34] sm:$0xf]
    %v103 = vld [vmem:[%s1 + $0x38] sm:$0xf]
    %v104 = vld [vmem:[%s1 + $0x3c] sm:$0xf]
    %v121 = vunpack.c.l.b16 %v89
    %v122 = vunpack.c.l.b16 %v90
    %v123 = vunpack.c.l.b16 %v91
    %v124 = vunpack.c.l.b16 %v92
    %v125 = vunpack.c.l.b16 %v93
    %v126 = vunpack.c.l.b16 %v94
    %v127 = vunpack.c.l.b16 %v95
    %v128 = vunpack.c.l.b16 %v96
    %v129 = vunpack.c.l.b16 %v97
    %v130 = vunpack.c.l.b16 %v98
    %v131 = vunpack.c.l.b16 %v99
    %v132 = vunpack.c.l.b16 %v100
    %v133 = vunpack.c.l.b16 %v101
    %v134 = vunpack.c.l.b16 %v102
    %v135 = vunpack.c.l.b16 %v103
    %v136 = vunpack.c.l.b16 %v104
    %v137 = vpack.c.b16 %v122, %v121
    %v138 = vpack.c.b16 %v124, %v123
    %v139 = vpack.c.b16 %v126, %v125
    %v140 = vpack.c.b16 %v128, %v127
    %v141 = vpack.c.b16 %v130, %v129
    %v142 = vpack.c.b16 %v132, %v131
    %v143 = vpack.c.b16 %v134, %v133
    %v144 = vpack.c.b16 %v136, %v135
    %153 = vmatprep.subr.bf16.mxu0 0
    %154 = vmatpush1.bf16.msra.mxu0 %v137
    %155 = vmatprep.subr.bf16.mxu0 0
    %156 = vmatpush1.bf16.msra.mxu0 %v138
    %157 = vmatprep.subr.bf16.mxu0 0
    %158 = vmatpush1.bf16.msra.mxu0 %v139
    %159 = vmatprep.subr.bf16.mxu0 0
    %160 = vmatpush1.bf16.msra.mxu0 %v140
    %161 = vmatprep.subr.bf16.mxu0 0
    %162 = vmatpush1.bf16.msra.mxu0 %v141
    %163 = vmatprep.subr.bf16.mxu0 0
    %164 = vmatpush1.bf16.msra.mxu0 %v142
    %165 = vmatprep.subr.bf16.mxu0 0
    %166 = vmatpush1.bf16.msra.mxu0 %v143
    %167 = vmatprep.subr.bf16.mxu0 0
    %168 = vmatpush1.bf16.msra.mxu0 %v144
    %169 = vmatprep.subr.bf16.mxu0 0
    %170 = vmatpush1.bf16.msra.mxu0 0
    %171 = vmatprep.subr.bf16.mxu0 0
    %172 = vmatpush1.bf16.msra.mxu0 0
    %173 = vmatprep.subr.bf16.mxu0 0
    %174 = vmatpush1.bf16.msra.mxu0 0
    %175 = vmatprep.subr.bf16.mxu0 0
    %176 = vmatpush1.bf16.msra.mxu0 0
    %177 = vmatprep.subr.bf16.mxu0 0
    %178 = vmatpush1.bf16.msra.mxu0 0
    %179 = vmatprep.subr.bf16.mxu0 0
    %180 = vmatpush1.bf16.msra.mxu0 0
    %181 = vmatprep.subr.bf16.mxu0 0
    %182 = vmatpush1.bf16.msra.mxu0 0
    %183 = vmatprep.subr.bf16.mxu0 0
    %184 = vmatpush1.bf16.msra.mxu0 0
    %185 = vmatprep.mubr.bf16.mxu0 0
    %186 = vmatmul.mubr.bf16.gmra.mrb[0].mxu0 %v81
    %v187 = vpop.f32.mrb[0].mxu0
    %v188 = vadd.f32 0.0, %v187
    %v189 = vpop.f32.mrb[0].mxu0
    %v190 = vpop.f32.mrb[0].mxu0
    %v191 = vadd.f32 0.0, %v190
    %v192 = vpop.f32.mrb[0].mxu0
    %193 = vmatprep.mubr.bf16.mxu0 0
    %194 = vmatmul.mubr.bf16.gmra.mrb[0].mxu0 %v82
    %v195 = vpop.f32.mrb[0].mxu0
    %v196 = vadd.f32 0.0, %v195
    %v197 = vpop.f32.mrb[0].mxu0
    %v198 = vpop.f32.mrb[0].mxu0
    %v199 = vadd.f32 0.0, %v198
    %v200 = vpop.f32.mrb[0].mxu0
    %201 = vmatprep.mubr.bf16.mxu0 0
    %202 = vmatmul.mubr.bf16.gmra.mrb[0].mxu0 %v83
    %v203 = vpop.f32.mrb[0].mxu0
    %v204 = vadd.f32 0.0, %v203
    %v205 = vpop.f32.mrb[0].mxu0
    %v206 = vpop.f32.mrb[0].mxu0
    %v207 = vadd.f32 0.0, %v206
    %v208 = vpop.f32.mrb[0].mxu0
    %209 = vmatprep.mubr.bf16.mxu0 0
    %210 = vmatmul.mubr.bf16.gmra.mrb[0].mxu0 %v84
    %v211 = vpop.f32.mrb[0].mxu0
    %v212 = vadd.f32 0.0, %v211
    %v213 = vpop.f32.mrb[0].mxu0
    %v214 = vpop.f32.mrb[0].mxu0
    %v215 = vadd.f32 0.0, %v214
    %v216 = vpop.f32.mrb[0].mxu0
    %217 = vmatprep.mubr.bf16.mxu0 0
    %218 = vmatmul.mubr.bf16.gmra.mrb[0].mxu0 %v85
    %v219 = vpop.f32.mrb[0].mxu0
    %v220 = vadd.f32 0.0, %v219
    %v221 = vpop.f32.mrb[0].mxu0
    %v222 = vpop.f32.mrb[0].mxu0
    %v223 = vadd.f32 0.0, %v222
    %v224 = vpop.f32.mrb[0].mxu0
    %225 = vmatprep.mubr.bf16.mxu0 0
    %226 = vmatmul.mubr.bf16.gmra.mrb[0].mxu0 %v86
    %v227 = vpop.f32.mrb[0].mxu0
    %v228 = vadd.f32 0.0, %v227
    %v229 = vpop.f32.mrb[0].mxu0
    %v230 = vpop.f32.mrb[0].mxu0
    %v231 = vadd.f32 0.0, %v230
    %v232 = vpop.f32.mrb[0].mxu0
    %233 = vmatprep.mubr.bf16.mxu0 0
    %234 = vmatmul.mubr.bf16.gmra.mrb[0].mxu0 %v87
    %v235 = vpop.f32.mrb[0].mxu0
    %v236 = vadd.f32 0.0, %v235
    %v237 = vpop.f32.mrb[0].mxu0
    %v238 = vpop.f32.mrb[0].mxu0
    %v239 = vadd.f32 0.0, %v238
    %v240 = vpop.f32.mrb[0].mxu0
    %241 = vmatprep.mubr.bf16.mxu0 0
    %242 = vmatmul.mubr.bf16.gmra.mrb[0].mxu0 %v88
    %v243 = vpop.f32.mrb[0].mxu0
    %v244 = vadd.f32 0.0, %v243
    %v245 = vpop.f32.mrb[0].mxu0
    %v246 = vpop.f32.mrb[0].mxu0
    %v247 = vadd.f32 0.0, %v246
    %v248 = vpop.f32.mrb[0].mxu0
    %249 = vdwg.mxu0
    %v250 = vld [vmem:[%s2] sm:$0x1]
    %v251 = vld [vmem:[%s3] sm:$0x1]
    %vm252 = vcmask 261120
    %v253 = vsel %vm252, %v188, 0.0
    %v254 = vsel %vm252, %v191, 0.0
    %v255 = vadd.f32 %v253, %v254
    %v256 = vsel %vm252, %v196, 0.0
    %v257 = vadd.f32 %v255, %v256
    %v258 = vsel %vm252, %v199, 0.0
    %v259 = vadd.f32 %v257, %v258
    %v260 = vsel %vm252, %v204, 0.0
    %v261 = vadd.f32 %v259, %v260
    %v262 = vsel %vm252, %v207, 0.0
    %v263 = vadd.f32 %v261, %v262
    %v264 = vsel %vm252, %v212, 0.0
    %v265 = vadd.f32 %v263, %v264
    %v266 = vsel %vm252, %v215, 0.0
    %v267 = vadd.f32 %v265, %v266
    %v268 = vsel %vm252, %v220, 0.0
    %v269 = vadd.f32 %v267, %v268
    %v270 = vsel %vm252, %v223, 0.0
    %v271 = vadd.f32 %v269, %v270
    %v272 = vsel %vm252, %v228, 0.0
    %v273 = vadd.f32 %v271, %v272
    %v274 = vsel %vm252, %v231, 0.0
    %v275 = vadd.f32 %v273, %v274
    %v276 = vsel %vm252, %v236, 0.0
    %v277 = vadd.f32 %v275, %v276
    %v278 = vsel %vm252, %v239, 0.0
    %v279 = vadd.f32 %v277, %v278
    %v280 = vsel %vm252, %v244, 0.0
    %v281 = vadd.f32 %v279, %v280
    %v282 = vsel %vm252, %v247, 0.0
    %v283 = vadd.f32 %v281, %v282
    %v284 = vrot.slane %v283, 4
    %v285 = vadd.f32 %v283, %v284
    %v286 = vrot.slane %v285, 2
    %v287 = vadd.f32 %v285, %v286
    %v288 = vrot.slane %v287, 1
    %v289 = vadd.f32 %v287, %v288
    %v290 = vmul.f32 %v289, 0.0078125
    %v291 = vsub.f32 %v188, %v290
    %v292 = vsub.f32 %v191, %v290
    %v293 = vsub.f32 %v196, %v290
    %v294 = vsub.f32 %v199, %v290
    %v295 = vsub.f32 %v204, %v290
    %v296 = vsub.f32 %v207, %v290
    %v297 = vsub.f32 %v212, %v290
    %v298 = vsub.f32 %v215, %v290
    %v299 = vsub.f32 %v220, %v290
    %v300 = vsub.f32 %v223, %v290
    %v301 = vsub.f32 %v228, %v290
    %v302 = vsub.f32 %v231, %v290
    %v303 = vsub.f32 %v236, %v290
    %v304 = vsub.f32 %v239, %v290
    %v305 = vsub.f32 %v244, %v290
    %v306 = vsub.f32 %v247, %v290
    %v307 = vmul.f32 %v291, %v291
    %v308 = vmul.f32 %v292, %v292
    %v309 = vmul.f32 %v293, %v293
    %v310 = vmul.f32 %v294, %v294
    %v311 = vmul.f32 %v295, %v295
    %v312 = vmul.f32 %v296, %v296
    %v313 = vmul.f32 %v297, %v297
    %v314 = vmul.f32 %v298, %v298
    %v315 = vmul.f32 %v299, %v299
    %v316 = vmul.f32 %v300, %v300
    %v317 = vmul.f32 %v301, %v301
    %v318 = vmul.f32 %v302, %v302
    %v319 = vmul.f32 %v303, %v303
    %v320 = vmul.f32 %v304, %v304
    %v321 = vmul.f32 %v305, %v305
    %v322 = vmul.f32 %v306, %v306
    %v323 = vsel %vm252, %v307, 0.0
    %v324 = vsel %vm252, %v308, 0.0
    %v325 = vadd.f32 %v323, %v324
    %v326 = vsel %vm252, %v309, 0.0
    %v327 = vadd.f32 %v325, %v326
    %v328 = vsel %vm252, %v310, 0.0
    %v329 = vadd.f32 %v327, %v328
    %v330 = vsel %vm252, %v311, 0.0
    %v331 = vadd.f32 %v329, %v330
    %v332 = vsel %vm252, %v312, 0.0
    %v333 = vadd.f32 %v331, %v332
    %v334 = vsel %vm252, %v313, 0.0
    %v335 = vadd.f32 %v333, %v334
    %v336 = vsel %vm252, %v314, 0.0
    %v337 = vadd.f32 %v335, %v336
    %v338 = vsel %vm252, %v315, 0.0
    %v339 = vadd.f32 %v337, %v338
    %v340 = vsel %vm252, %v316, 0.0
    %v341 = vadd.f32 %v339, %v340
    %v342 = vsel %vm252, %v317, 0.0
    %v343 = vadd.f32 %v341, %v342
    %v344 = vsel %vm252, %v318, 0.0
    %v345 = vadd.f32 %v343, %v344
    %v346 = vsel %vm252, %v319, 0.0
    %v347 = vadd.f32 %v345, %v346
    %v348 = vsel %vm252, %v320, 0.0
    %v349 = vadd.f32 %v347, %v348
    %v350 = vsel %vm252, %v321, 0.0
    %v351 = vadd.f32 %v349, %v350
    %v352 = vsel %vm252, %v322, 0.0
    %v353 = vadd.f32 %v351, %v352
    %v354 = vrot.slane %v353, 4
    %v355 = vadd.f32 %v353, %v354
    %v356 = vrot.slane %v355, 2
    %v357 = vadd.f32 %v355, %v356
    %v358 = vrot.slane %v357, 1
    %v359 = vadd.f32 %v357, %v358
    %v360 = vmul.f32 %v359, 0.0078125
    %v361 = vadd.f32 %v360, 1e-05
    %v362 = vrsqrt.pop %v361
    %v363 = vmul.f32 %v291, %v362
    %v364 = vmul.f32 %v292, %v362
    %v365 = vmul.f32 %v293, %v362
    %v366 = vmul.f32 %v294, %v362
    %v367 = vmul.f32 %v295, %v362
    %v368 = vmul.f32 %v296, %v362
    %v369 = vmul.f32 %v297, %v362
    %v370 = vmul.f32 %v298, %v362
    %v371 = vmul.f32 %v299, %v362
    %v372 = vmul.f32 %v300, %v362
    %v373 = vmul.f32 %v301, %v362
    %v374 = vmul.f32 %v302, %v362
    %v375 = vmul.f32 %v303, %v362
    %v376 = vmul.f32 %v304, %v362
    %v377 = vmul.f32 %v305, %v362
    %v378 = vmul.f32 %v306, %v362
    %v380 = vlaneseq
    %v381 = vshrl.u32 %v380, 7
    %v382 = vsub.s32 0, %v381
    %v383 = vrot.slane %v250, %v382
    %v385 = vmul.f32 %v363, %v383
    %v386 = vmul.f32 %v364, %v383
    %v387 = vmul.f32 %v365, %v383
    %v388 = vmul.f32 %v366, %v383
    %v389 = vmul.f32 %v367, %v383
    %v390 = vmul.f32 %v368, %v383
    %v391 = vmul.f32 %v369, %v383
    %v392 = vmul.f32 %v370, %v383
    %v393 = vmul.f32 %v371, %v383
    %v394 = vmul.f32 %v372, %v383
    %v395 = vmul.f32 %v373, %v383
    %v396 = vmul.f32 %v374, %v383
    %v397 = vmul.f32 %v375, %v383
    %v398 = vmul.f32 %v376, %v383
    %v399 = vmul.f32 %v377, %v383
    %v400 = vmul.f32 %v378, %v383
    %v402 = vlaneseq
    %v403 = vshrl.u32 %v402, 7
    %v404 = vsub.s32 0, %v403
    %v405 = vrot.slane %v251, %v404
    %v407 = vadd.f32 %v385, %v405
    %v408 = vadd.f32 %v386, %v405
    %v409 = vadd.f32 %v387, %v405
    %v410 = vadd.f32 %v388, %v405
    %v411 = vadd.f32 %v389, %v405
    %v412 = vadd.f32 %v390, %v405
    %v413 = vadd.f32 %v391, %v405
    %v414 = vadd.f32 %v392, %v405
    %v415 = vadd.f32 %v393, %v405
    %v416 = vadd.f32 %v394, %v405
    %v417 = vadd.f32 %v395, %v405
    %v418 = vadd.f32 %v396, %v405
    %v419 = vadd.f32 %v397, %v405
    %v420 = vadd.f32 %v398, %v405
    %v421 = vadd.f32 %v399, %v405
    %v422 = vadd.f32 %v400, %v405
    %v423 = vmax.f32 %v407, 0.0
    %v424 = vmax.f32 %v408, 0.0
    %v425 = vmax.f32 %v409, 0.0
    %v426 = vmax.f32 %v410, 0.0
    %v427 = vmax.f32 %v411, 0.0
    %v428 = vmax.f32 %v412, 0.0
    %v429 = vmax.f32 %v413, 0.0
    %v430 = vmax.f32 %v414, 0.0
    %v431 = vmax.f32 %v415, 0.0
    %v432 = vmax.f32 %v416, 0.0
    %v433 = vmax.f32 %v417, 0.0
    %v434 = vmax.f32 %v418, 0.0
    %v435 = vmax.f32 %v419, 0.0
    %v436 = vmax.f32 %v420, 0.0
    %v437 = vmax.f32 %v421, 0.0
    %v438 = vmax.f32 %v422, 0.0
    %v439 = vpack.c.bf16 %v424, %v423
    %v440 = vpack.c.bf16 %v426, %v425
    %v441 = vpack.c.bf16 %v428, %v427
    %v442 = vpack.c.bf16 %v430, %v429
    %v443 = vpack.c.bf16 %v432, %v431
    %v444 = vpack.c.bf16 %v434, %v433
    %v445 = vpack.c.bf16 %v436, %v435
    %v446 = vpack.c.bf16 %v438, %v437
    %v447 = vlaneseq
    %v448 = vshrl.u32 %v447, 7
    %v449 = vadd.s32 %v448, 8
    %v450 = vadd.s32 %v448, 16
    %v451 = vadd.s32 %v448, 24
    %v452 = vadd.s32 %v448, 32
    %v453 = vadd.s32 %v448, 40
    %v454 = vadd.s32 %v448, 48
    %v455 = vadd.s32 %v448, 56
    %v456 = vadd.s32 %v448, 64
    %v457 = vadd.s32 %v448, 72
    %v458 = vadd.s32 %v448, 80
    %v459 = vadd.s32 %v448, 88
    %v460 = vadd.s32 %v448, 96
    %v461 = vadd.s32 %v448, 104
    %v462 = vadd.s32 %v448, 112
    %v463 = vadd.s32 %v448, 120
    %v464 = vand.u32 %v448, 63
    %v465 = vand.u32 %v449, 63
    %v466 = vand.u32 %v450, 63
    %v467 = vand.u32 %v451, 63
    %v468 = vand.u32 %v452, 63
    %v469 = vand.u32 %v453, 63
    %v470 = vand.u32 %v454, 63
    %v471 = vand.u32 %v455, 63
    %v472 = vand.u32 %v456, 63
    %v473 = vand.u32 %v457, 63
    %v474 = vand.u32 %v458, 63
    %v475 = vand.u32 %v459, 63
    %v476 = vand.u32 %v460, 63
    %v477 = vand.u32 %v461, 63
    %v478 = vand.u32 %v462, 63
    %v479 = vand.u32 %v463, 63
    %v480 = vand.u32 %v448, 7
    %v481 = vand.u32 %v449, 7
    %v482 = vand.u32 %v450, 7
    %v483 = vand.u32 %v451, 7
    %v484 = vand.u32 %v452, 7
    %v485 = vand.u32 %v453, 7
    %v486 = vand.u32 %v454, 7
    %v487 = vand.u32 %v455, 7
    %v488 = vand.u32 %v456, 7
    %v489 = vand.u32 %v457, 7
    %v490 = vand.u32 %v458, 7
    %v491 = vand.u32 %v459, 7
    %v492 = vand.u32 %v460, 7
    %v493 = vand.u32 %v461, 7
    %v494 = vand.u32 %v462, 7
    %v495 = vand.u32 %v463, 7
    %s496 = scalar_lea.vmem [#allocation5], 64
    %v497 = vld [vmem:[%s496] sm:$0xf]
    %v498 = vld [vmem:[%s496 + $0x4] sm:$0xf]
    %v499 = vld [vmem:[%s496 + $0x8] sm:$0xf]
    %v500 = vld [vmem:[%s496 + $0xc] sm:$0xf]
    %v501 = vrot.slane %v423, 7
    %v502 = vrot.slane %v424, 7
    %v503 = vrot.slane %v425, 7
    %v504 = vrot.slane %v426, 7
    %v505 = vrot.slane %v427, 7
    %v506 = vrot.slane %v428, 7
    %v507 = vrot.slane %v429, 7
    %v508 = vrot.slane %v430, 7
    %v509 = vrot.slane %v431, 7
    %v510 = vrot.slane %v432, 7
    %v511 = vrot.slane %v433, 7
    %v512 = vrot.slane %v434, 7
    %v513 = vrot.slane %v435, 7
    %v514 = vrot.slane %v436, 7
    %v515 = vrot.slane %v437, 7
    %v516 = vrot.slane %v438, 7
    %vm517 = vcmp.lt.s32.totalorder %v448, 1
    %v518 = vsel %vm517, %v515, %v516
    %v519 = vsel %vm517, %v514, %v515
    %v520 = vsel %vm517, %v513, %v514
    %v521 = vsel %vm517, %v512, %v513
    %v522 = vsel %vm517, %v511, %v512
    %v523 = vsel %vm517, %v510, %v511
    %v524 = vsel %vm517, %v509, %v510
    %v525 = vsel %vm517, %v508, %v509
    %v526 = vsel %vm517, %v507, %v508
    %v527 = vsel %vm517, %v506, %v507
    %v528 = vsel %vm517, %v505, %v506
    %v529 = vsel %vm517, %v504, %v505
    %v530 = vsel %vm517, %v503, %v504
    %v531 = vsel %vm517, %v502, %v503
    %v532 = vsel %vm517, %v501, %v502
    %v533 = vsel %vm517, %v516, %v501
    %vm534 = vcmp.ge.s32.totalorder %v464, 8
    %vm535 = vcmp.ge.s32.totalorder %v465, 8
    %vm536 = vcmp.ge.s32.totalorder %v466, 8
    %vm537 = vcmp.ge.s32.totalorder %v467, 8
    %vm538 = vcmp.ge.s32.totalorder %v468, 8
    %vm539 = vcmp.ge.s32.totalorder %v469, 8
    %vm540 = vcmp.ge.s32.totalorder %v470, 8
    %vm541 = vcmp.ge.s32.totalorder %v471, 8
    %vm542 = vcmp.ge.s32.totalorder %v472, 8
    %vm543 = vcmp.ge.s32.totalorder %v473, 8
    %vm544 = vcmp.ge.s32.totalorder %v474, 8
    %vm545 = vcmp.ge.s32.totalorder %v475, 8
    %vm546 = vcmp.ge.s32.totalorder %v476, 8
    %vm547 = vcmp.ge.s32.totalorder %v477, 8
    %vm548 = vcmp.ge.s32.totalorder %v478, 8
    %vm549 = vcmp.ge.s32.totalorder %v479, 8
    %vm550 = vcmp.ge.s32.totalorder %v480, 1
    %vm551 = vcmp.ge.s32.totalorder %v481, 1
    %vm552 = vcmp.ge.s32.totalorder %v482, 1
    %vm553 = vcmp.ge.s32.totalorder %v483, 1
    %vm554 = vcmp.ge.s32.totalorder %v484, 1
    %vm555 = vcmp.ge.s32.totalorder %v485, 1
    %vm556 = vcmp.ge.s32.totalorder %v486, 1
    %vm557 = vcmp.ge.s32.totalorder %v487, 1
    %vm558 = vcmp.ge.s32.totalorder %v488, 1
    %vm559 = vcmp.ge.s32.totalorder %v489, 1
    %vm560 = vcmp.ge.s32.totalorder %v490, 1
    %vm561 = vcmp.ge.s32.totalorder %v491, 1
    %vm562 = vcmp.ge.s32.totalorder %v492, 1
    %vm563 = vcmp.ge.s32.totalorder %v493, 1
    %vm564 = vcmp.ge.s32.totalorder %v494, 1
    %vm565 = vcmp.ge.s32.totalorder %v495, 1
    %vm566 = vmand %vm534, %vm550
    %vm567 = vmand %vm535, %vm551
    %vm568 = vmand %vm536, %vm552
    %vm569 = vmand %vm537, %vm553
    %vm570 = vmand %vm538, %vm554
    %vm571 = vmand %vm539, %vm555
    %vm572 = vmand %vm540, %vm556
    %vm573 = vmand %vm541, %vm557
    %vm574 = vmand %vm542, %vm558
    %vm575 = vmand %vm543, %vm559
    %vm576 = vmand %vm544, %vm560
    %vm577 = vmand %vm545, %vm561
    %vm578 = vmand %vm546, %vm562
    %vm579 = vmand %vm547, %vm563
    %vm580 = vmand %vm548, %vm564
    %vm581 = vmand %vm549, %vm565
    %v582 = vsel %vm566, %v518, 0.0
    %v583 = vsel %vm567, %v533, 0.0
    %v584 = vsel %vm568, %v532, 0.0
    %v585 = vsel %vm569, %v531, 0.0
    %v586 = vsel %vm570, %v530, 0.0
    %v587 = vsel %vm571, %v529, 0.0
    %v588 = vsel %vm572, %v528, 0.0
    %v589 = vsel %vm573, %v527, 0.0
    %v590 = vsel %vm574, %v526, 0.0
    %v591 = vsel %vm575, %v525, 0.0
    %v592 = vsel %vm576, %v524, 0.0
    %v593 = vsel %vm577, %v523, 0.0
    %v594 = vsel %vm578, %v522, 0.0
    %v595 = vsel %vm579, %v521, 0.0
    %v596 = vsel %vm580, %v520, 0.0
    %v597 = vsel %vm581, %v519, 0.0
    %v598 = vpack.c.bf16 %v583, %v582
    %v599 = vpack.c.bf16 %v585, %v584
    %v600 = vpack.c.bf16 %v587, %v586
    %v601 = vpack.c.bf16 %v589, %v588
    %v602 = vpack.c.bf16 %v591, %v590
    %v603 = vpack.c.bf16 %v593, %v592
    %v604 = vpack.c.bf16 %v595, %v594
    %v605 = vpack.c.bf16 %v597, %v596
    %v606 = vld [vmem:[#allocation5] sm:$0xf]
    %v607 = vld [vmem:[#allocation5 + $0x4] sm:$0xf]
    %v608 = vld [vmem:[#allocation5 + $0x8] sm:$0xf]
    %v609 = vld [vmem:[#allocation5 + $0xc] sm:$0xf]
    %v614 = vunpack.c.l.b16 %v606
    %v615 = vunpack.c.l.b16 %v607
    %v616 = vunpack.c.l.b16 %v608
    %v617 = vunpack.c.l.b16 %v609
    %v618 = vpack.c.b16 %v615, %v614
    %v619 = vpack.c.b16 %v617, %v616
    %v623 = vsel %vm252, %v598, 0
    %v626 = vsel %vm252, %v599, 0
    %v629 = vsel %vm252, %v600, 0
    %v632 = vsel %vm252, %v601, 0
    %v635 = vsel %vm252, %v602, 0
    %v638 = vsel %vm252, %v603, 0
    %v641 = vsel %vm252, %v604, 0
    %v644 = vsel %vm252, %v605, 0
    %646 = vmatprep.subr.bf16.mxu0 0
    %647 = vmatpush1.bf16.msra.mxu0 %v618
    %648 = vmatprep.subr.bf16.mxu0 0
    %649 = vmatpush1.bf16.msra.mxu0 %v619
    %650 = vmatprep.subr.bf16.mxu0 0
    %651 = vmatpush1.bf16.msra.mxu0 0
    %652 = vmatprep.subr.bf16.mxu0 0
    %653 = vmatpush1.bf16.msra.mxu0 0
    %654 = vmatprep.subr.bf16.mxu0 0
    %655 = vmatpush1.bf16.msra.mxu0 0
    %656 = vmatprep.subr.bf16.mxu0 0
    %657 = vmatpush1.bf16.msra.mxu0 0
    %658 = vmatprep.subr.bf16.mxu0 0
    %659 = vmatpush1.bf16.msra.mxu0 0
    %660 = vmatprep.subr.bf16.mxu0 0
    %661 = vmatpush1.bf16.msra.mxu0 0
    %662 = vmatprep.subr.bf16.mxu0 0
    %663 = vmatpush1.bf16.msra.mxu0 0
    %664 = vmatprep.subr.bf16.mxu0 0
    %665 = vmatpush1.bf16.msra.mxu0 0
    %666 = vmatprep.subr.bf16.mxu0 0
    %667 = vmatpush1.bf16.msra.mxu0 0
    %668 = vmatprep.subr.bf16.mxu0 0
    %669 = vmatpush1.bf16.msra.mxu0 0
    %670 = vmatprep.subr.bf16.mxu0 0
    %671 = vmatpush1.bf16.msra.mxu0 0
    %672 = vmatprep.subr.bf16.mxu0 0
    %673 = vmatpush1.bf16.msra.mxu0 0
    %674 = vmatprep.subr.bf16.mxu0 0
    %675 = vmatpush1.bf16.msra.mxu0 0
    %676 = vmatprep.subr.bf16.mxu0 0
    %677 = vmatpush1.bf16.msra.mxu0 0
    %678 = vmatprep.mubr.bf16.mxu0 0
    %679 = vmatmul.mubr.bf16.gmra.mrb[0].mxu0 %v623
    %v680 = vpop.f32.mrb[0].mxu0
    %v681 = vadd.f32 0.0, %v680
    %v682 = vpop.f32.mrb[0].mxu0
    %v683 = vpop.f32.mrb[0].mxu0
    %v684 = vadd.f32 0.0, %v683
    %v685 = vpop.f32.mrb[0].mxu0
    %686 = vmatprep.mubr.bf16.mxu0 0
    %687 = vmatmul.mubr.bf16.gmra.mrb[0].mxu0 %v626
    %v688 = vpop.f32.mrb[0].mxu0
    %v689 = vadd.f32 0.0, %v688
    %v690 = vpop.f32.mrb[0].mxu0
    %v691 = vpop.f32.mrb[0].mxu0
    %v692 = vadd.f32 0.0, %v691
    %v693 = vpop.f32.mrb[0].mxu0
    %694 = vmatprep.mubr.bf16.mxu0 0
    %695 = vmatmul.mubr.bf16.gmra.mrb[0].mxu0 %v629
    %v696 = vpop.f32.mrb[0].mxu0
    %v697 = vadd.f32 0.0, %v696
    %v698 = vpop.f32.mrb[0].mxu0
    %v699 = vpop.f32.mrb[0].mxu0
    %v700 = vadd.f32 0.0, %v699
    %v701 = vpop.f32.mrb[0].mxu0
    %702 = vmatprep.mubr.bf16.mxu0 0
    %703 = vmatmul.mubr.bf16.gmra.mrb[0].mxu0 %v632
    %v704 = vpop.f32.mrb[0].mxu0
    %v705 = vadd.f32 0.0, %v704
    %v706 = vpop.f32.mrb[0].mxu0
    %v707 = vpop.f32.mrb[0].mxu0
    %v708 = vadd.f32 0.0, %v707
    %v709 = vpop.f32.mrb[0].mxu0
    %710 = vmatprep.mubr.bf16.mxu0 0
    %711 = vmatmul.mubr.bf16.gmra.mrb[0].mxu0 %v635
    %v712 = vpop.f32.mrb[0].mxu0
    %v713 = vadd.f32 0.0, %v712
    %v714 = vpop.f32.mrb[0].mxu0
    %v715 = vpop.f32.mrb[0].mxu0
    %v716 = vadd.f32 0.0, %v715
    %v717 = vpop.f32.mrb[0].mxu0
    %718 = vmatprep.mubr.bf16.mxu0 0
    %719 = vmatmul.mubr.bf16.gmra.mrb[0].mxu0 %v638
    %v720 = vpop.f32.mrb[0].mxu0
    %v721 = vadd.f32 0.0, %v720
    %v722 = vpop.f32.mrb[0].mxu0
    %v723 = vpop.f32.mrb[0].mxu0
    %v724 = vadd.f32 0.0, %v723
    %v725 = vpop.f32.mrb[0].mxu0
    %726 = vmatprep.mubr.bf16.mxu0 0
    %727 = vmatmul.mubr.bf16.gmra.mrb[0].mxu0 %v641
    %v728 = vpop.f32.mrb[0].mxu0
    %v729 = vadd.f32 0.0, %v728
    %v730 = vpop.f32.mrb[0].mxu0
    %v731 = vpop.f32.mrb[0].mxu0
    %v732 = vadd.f32 0.0, %v731
    %v733 = vpop.f32.mrb[0].mxu0
    %734 = vmatprep.mubr.bf16.mxu0 0
    %735 = vmatmul.mubr.bf16.gmra.mrb[0].mxu0 %v644
    %v736 = vpop.f32.mrb[0].mxu0
    %v737 = vadd.f32 0.0, %v736
    %v738 = vpop.f32.mrb[0].mxu0
    %v739 = vpop.f32.mrb[0].mxu0
    %v740 = vadd.f32 0.0, %v739
    %v741 = vpop.f32.mrb[0].mxu0
    %742 = vdwg.mxu0
    %v747 = vunpack.c.l.b16 %v497
    %v748 = vunpack.c.l.b16 %v498
    %v749 = vunpack.c.l.b16 %v499
    %v750 = vunpack.c.l.b16 %v500
    %v751 = vpack.c.b16 %v748, %v747
    %v752 = vpack.c.b16 %v750, %v749
    %v756 = vsel %vm252, %v439, 0
    %v759 = vsel %vm252, %v440, 0
    %v762 = vsel %vm252, %v441, 0
    %v765 = vsel %vm252, %v442, 0
    %v768 = vsel %vm252, %v443, 0
    %v771 = vsel %vm252, %v444, 0
    %v774 = vsel %vm252, %v445, 0
    %v777 = vsel %vm252, %v446, 0
    %779 = vmatprep.subr.bf16.mxu0 0
    %780 = vmatpush1.bf16.msra.mxu0 %v751
    %781 = vmatprep.subr.bf16.mxu0 0
    %782 = vmatpush1.bf16.msra.mxu0 %v752
    %783 = vmatprep.subr.bf16.mxu0 0
    %784 = vmatpush1.bf16.msra.mxu0 0
    %785 = vmatprep.subr.bf16.mxu0 0
    %786 = vmatpush1.bf16.msra.mxu0 0
    %787 = vmatprep.subr.bf16.mxu0 0
    %788 = vmatpush1.bf16.msra.mxu0 0
    %789 = vmatprep.subr.bf16.mxu0 0
    %790 = vmatpush1.bf16.msra.mxu0 0
    %791 = vmatprep.subr.bf16.mxu0 0
    %792 = vmatpush1.bf16.msra.mxu0 0
    %793 = vmatprep.subr.bf16.mxu0 0
    %794 = vmatpush1.bf16.msra.mxu0 0
    %795 = vmatprep.subr.bf16.mxu0 0
    %796 = vmatpush1.bf16.msra.mxu0 0
    %797 = vmatprep.subr.bf16.mxu0 0
    %798 = vmatpush1.bf16.msra.mxu0 0
    %799 = vmatprep.subr.bf16.mxu0 0
    %800 = vmatpush1.bf16.msra.mxu0 0
    %801 = vmatprep.subr.bf16.mxu0 0
    %802 = vmatpush1.bf16.msra.mxu0 0
    %803 = vmatprep.subr.bf16.mxu0 0
    %804 = vmatpush1.bf16.msra.mxu0 0
    %805 = vmatprep.subr.bf16.mxu0 0
    %806 = vmatpush1.bf16.msra.mxu0 0
    %807 = vmatprep.subr.bf16.mxu0 0
    %808 = vmatpush1.bf16.msra.mxu0 0
    %809 = vmatprep.subr.bf16.mxu0 0
    %810 = vmatpush1.bf16.msra.mxu0 0
    %811 = vmatprep.mubr.bf16.mxu0 0
    %812 = vmatmul.mubr.bf16.gmra.mrb[0].mxu0 %v756
    %v813 = vpop.f32.mrb[0].mxu0
    %v814 = vadd.f32 %v681, %v813
    %v815 = vpop.f32.mrb[0].mxu0
    %v816 = vpop.f32.mrb[0].mxu0
    %v817 = vadd.f32 %v684, %v816
    %v818 = vpop.f32.mrb[0].mxu0
    %819 = vmatprep.mubr.bf16.mxu0 0
    %820 = vmatmul.mubr.bf16.gmra.mrb[0].mxu0 %v759
    %v821 = vpop.f32.mrb[0].mxu0
    %v822 = vadd.f32 %v689, %v821
    %v823 = vpop.f32.mrb[0].mxu0
    %v824 = vpop.f32.mrb[0].mxu0
    %v825 = vadd.f32 %v692, %v824
    %v826 = vpop.f32.mrb[0].mxu0
    %827 = vmatprep.mubr.bf16.mxu0 0
    %828 = vmatmul.mubr.bf16.gmra.mrb[0].mxu0 %v762
    %v829 = vpop.f32.mrb[0].mxu0
    %v830 = vadd.f32 %v697, %v829
    %v831 = vpop.f32.mrb[0].mxu0
    %v832 = vpop.f32.mrb[0].mxu0
    %v833 = vadd.f32 %v700, %v832
    %v834 = vpop.f32.mrb[0].mxu0
    %835 = vmatprep.mubr.bf16.mxu0 0
    %836 = vmatmul.mubr.bf16.gmra.mrb[0].mxu0 %v765
    %v837 = vpop.f32.mrb[0].mxu0
    %v838 = vadd.f32 %v705, %v837
    %v839 = vpop.f32.mrb[0].mxu0
    %v840 = vpop.f32.mrb[0].mxu0
    %v841 = vadd.f32 %v708, %v840
    %v842 = vpop.f32.mrb[0].mxu0
    %843 = vmatprep.mubr.bf16.mxu0 0
    %844 = vmatmul.mubr.bf16.gmra.mrb[0].mxu0 %v768
    %v845 = vpop.f32.mrb[0].mxu0
    %v846 = vadd.f32 %v713, %v845
    %v847 = vpop.f32.mrb[0].mxu0
    %v848 = vpop.f32.mrb[0].mxu0
    %v849 = vadd.f32 %v716, %v848
    %v850 = vpop.f32.mrb[0].mxu0
    %851 = vmatprep.mubr.bf16.mxu0 0
    %852 = vmatmul.mubr.bf16.gmra.mrb[0].mxu0 %v771
    %v853 = vpop.f32.mrb[0].mxu0
    %v854 = vadd.f32 %v721, %v853
    %v855 = vpop.f32.mrb[0].mxu0
    %v856 = vpop.f32.mrb[0].mxu0
    %v857 = vadd.f32 %v724, %v856
    %v858 = vpop.f32.mrb[0].mxu0
    %859 = vmatprep.mubr.bf16.mxu0 0
    %860 = vmatmul.mubr.bf16.gmra.mrb[0].mxu0 %v774
    %v861 = vpop.f32.mrb[0].mxu0
    %v862 = vadd.f32 %v729, %v861
    %v863 = vpop.f32.mrb[0].mxu0
    %v864 = vpop.f32.mrb[0].mxu0
    %v865 = vadd.f32 %v732, %v864
    %v866 = vpop.f32.mrb[0].mxu0
    %867 = vmatprep.mubr.bf16.mxu0 0
    %868 = vmatmul.mubr.bf16.gmra.mrb[0].mxu0 %v777
    %v869 = vpop.f32.mrb[0].mxu0
    %v870 = vadd.f32 %v737, %v869
    %v871 = vpop.f32.mrb[0].mxu0
    %v872 = vpop.f32.mrb[0].mxu0
    %v873 = vadd.f32 %v740, %v872
    %v874 = vpop.f32.mrb[0].mxu0
    %875 = vdwg.mxu0
    %v876 = vsel %vm534, %v438, 0.0
    %v877 = vsel %vm535, %v423, 0.0
    %v878 = vsel %vm536, %v424, 0.0
    %v879 = vsel %vm537, %v425, 0.0
    %v880 = vsel %vm538, %v426, 0.0
    %v881 = vsel %vm539, %v427, 0.0
    %v882 = vsel %vm540, %v428, 0.0
    %v883 = vsel %vm541, %v429, 0.0
    %v884 = vsel %vm542, %v430, 0.0
    %v885 = vsel %vm543, %v431, 0.0
    %v886 = vsel %vm544, %v432, 0.0
    %v887 = vsel %vm545, %v433, 0.0
    %v888 = vsel %vm546, %v434, 0.0
    %v889 = vsel %vm547, %v435, 0.0
    %v890 = vsel %vm548, %v436, 0.0
    %v891 = vsel %vm549, %v437, 0.0
    %v892 = vpack.c.bf16 %v877, %v876
    %v893 = vpack.c.bf16 %v879, %v878
    %v894 = vpack.c.bf16 %v881, %v880
    %v895 = vpack.c.bf16 %v883, %v882
    %v896 = vpack.c.bf16 %v885, %v884
    %v897 = vpack.c.bf16 %v887, %v886
    %v898 = vpack.c.bf16 %v889, %v888
    %v899 = vpack.c.bf16 %v891, %v890
    %s900 = scalar_lea.vmem [#allocation5], 16
    %v901 = vld [vmem:[%s900] sm:$0xf]
    %v902 = vld [vmem:[%s900 + $0x4] sm:$0xf]
    %v903 = vld [vmem:[%s900 + $0x8] sm:$0xf]
    %v904 = vld [vmem:[%s900 + $0xc] sm:$0xf]
    %v909 = vunpack.c.l.b16 %v901
    %v910 = vunpack.c.l.b16 %v902
    %v911 = vunpack.c.l.b16 %v903
    %v912 = vunpack.c.l.b16 %v904
    %v913 = vpack.c.b16 %v910, %v909
    %v914 = vpack.c.b16 %v912, %v911
    %v918 = vsel %vm252, %v892, 0
    %v921 = vsel %vm252, %v893, 0
    %v924 = vsel %vm252, %v894, 0
    %v927 = vsel %vm252, %v895, 0
    %v930 = vsel %vm252, %v896, 0
    %v933 = vsel %vm252, %v897, 0
    %v936 = vsel %vm252, %v898, 0
    %v939 = vsel %vm252, %v899, 0
    %941 = vmatprep.subr.bf16.mxu0 0
    %942 = vmatpush1.bf16.msra.mxu0 %v913
    %943 = vmatprep.subr.bf16.mxu0 0
    %944 = vmatpush1.bf16.msra.mxu0 %v914
    %945 = vmatprep.subr.bf16.mxu0 0
    %946 = vmatpush1.bf16.msra.mxu0 0
    %947 = vmatprep.subr.bf16.mxu0 0
    %948 = vmatpush1.bf16.msra.mxu0 0
    %949 = vmatprep.subr.bf16.mxu0 0
    %950 = vmatpush1.bf16.msra.mxu0 0
    %951 = vmatprep.subr.bf16.mxu0 0
    %952 = vmatpush1.bf16.msra.mxu0 0
    %953 = vmatprep.subr.bf16.mxu0 0
    %954 = vmatpush1.bf16.msra.mxu0 0
    %955 = vmatprep.subr.bf16.mxu0 0
    %956 = vmatpush1.bf16.msra.mxu0 0
    %957 = vmatprep.subr.bf16.mxu0 0
    %958 = vmatpush1.bf16.msra.mxu0 0
    %959 = vmatprep.subr.bf16.mxu0 0
    %960 = vmatpush1.bf16.msra.mxu0 0
    %961 = vmatprep.subr.bf16.mxu0 0
    %962 = vmatpush1.bf16.msra.mxu0 0
    %963 = vmatprep.subr.bf16.mxu0 0
    %964 = vmatpush1.bf16.msra.mxu0 0
    %965 = vmatprep.subr.bf16.mxu0 0
    %966 = vmatpush1.bf16.msra.mxu0 0
    %967 = vmatprep.subr.bf16.mxu0 0
    %968 = vmatpush1.bf16.msra.mxu0 0
    %969 = vmatprep.subr.bf16.mxu0 0
    %970 = vmatpush1.bf16.msra.mxu0 0
    %971 = vmatprep.subr.bf16.mxu0 0
    %972 = vmatpush1.bf16.msra.mxu0 0
    %973 = vmatprep.mubr.bf16.mxu0 0
    %974 = vmatmul.mubr.bf16.gmra.mrb[0].mxu0 %v918
    %v975 = vpop.f32.mrb[0].mxu0
    %v976 = vadd.f32 0.0, %v975
    %v977 = vpop.f32.mrb[0].mxu0
    %v978 = vpop.f32.mrb[0].mxu0
    %v979 = vadd.f32 0.0, %v978
    %v980 = vpop.f32.mrb[0].mxu0
    %981 = vmatprep.mubr.bf16.mxu0 0
    %982 = vmatmul.mubr.bf16.gmra.mrb[0].mxu0 %v921
    %v983 = vpop.f32.mrb[0].mxu0
    %v984 = vadd.f32 0.0, %v983
    %v985 = vpop.f32.mrb[0].mxu0
    %v986 = vpop.f32.mrb[0].mxu0
    %v987 = vadd.f32 0.0, %v986
    %v988 = vpop.f32.mrb[0].mxu0
    %989 = vmatprep.mubr.bf16.mxu0 0
    %990 = vmatmul.mubr.bf16.gmra.mrb[0].mxu0 %v924
    %v991 = vpop.f32.mrb[0].mxu0
    %v992 = vadd.f32 0.0, %v991
    %v993 = vpop.f32.mrb[0].mxu0
    %v994 = vpop.f32.mrb[0].mxu0
    %v995 = vadd.f32 0.0, %v994
    %v996 = vpop.f32.mrb[0].mxu0
    %997 = vmatprep.mubr.bf16.mxu0 0
    %998 = vmatmul.mubr.bf16.gmra.mrb[0].mxu0 %v927
    %v999 = vpop.f32.mrb[0].mxu0
    %v1000 = vadd.f32 0.0, %v999
    %v1001 = vpop.f32.mrb[0].mxu0
    %v1002 = vpop.f32.mrb[0].mxu0
    %v1003 = vadd.f32 0.0, %v1002
    %v1004 = vpop.f32.mrb[0].mxu0
    %1005 = vmatprep.mubr.bf16.mxu0 0
    %1006 = vmatmul.mubr.bf16.gmra.mrb[0].mxu0 %v930
    %v1007 = vpop.f32.mrb[0].mxu0
    %v1008 = vadd.f32 0.0, %v1007
    %v1009 = vpop.f32.mrb[0].mxu0
    %v1010 = vpop.f32.mrb[0].mxu0
    %v1011 = vadd.f32 0.0, %v1010
    %v1012 = vpop.f32.mrb[0].mxu0
    %1013 = vmatprep.mubr.bf16.mxu0 0
    %1014 = vmatmul.mubr.bf16.gmra.mrb[0].mxu0 %v933
    %v1015 = vpop.f32.mrb[0].mxu0
    %v1016 = vadd.f32 0.0, %v1015
    %v1017 = vpop.f32.mrb[0].mxu0
    %v1018 = vpop.f32.mrb[0].mxu0
    %v1019 = vadd.f32 0.0, %v1018
    %v1020 = vpop.f32.mrb[0].mxu0
    %1021 = vmatprep.mubr.bf16.mxu0 0
    %1022 = vmatmul.mubr.bf16.gmra.mrb[0].mxu0 %v936
    %v1023 = vpop.f32.mrb[0].mxu0
    %v1024 = vadd.f32 0.0, %v1023
    %v1025 = vpop.f32.mrb[0].mxu0
    %v1026 = vpop.f32.mrb[0].mxu0
    %v1027 = vadd.f32 0.0, %v1026
    %v1028 = vpop.f32.mrb[0].mxu0
    %1029 = vmatprep.mubr.bf16.mxu0 0
    %1030 = vmatmul.mubr.bf16.gmra.mrb[0].mxu0 %v939
    %v1031 = vpop.f32.mrb[0].mxu0
    %v1032 = vadd.f32 0.0, %v1031
    %v1033 = vpop.f32.mrb[0].mxu0
    %v1034 = vpop.f32.mrb[0].mxu0
    %v1035 = vadd.f32 0.0, %v1034
    %v1036 = vpop.f32.mrb[0].mxu0
    %1037 = vdwg.mxu0
    %v1038 = vadd.f32 %v814, %v976
    %v1039 = vadd.f32 %v817, %v979
    %v1040 = vadd.f32 %v822, %v984
    %v1041 = vadd.f32 %v825, %v987
    %v1042 = vadd.f32 %v830, %v992
    %v1043 = vadd.f32 %v833, %v995
    %v1044 = vadd.f32 %v838, %v1000
    %v1045 = vadd.f32 %v841, %v1003
    %v1046 = vadd.f32 %v846, %v1008
    %v1047 = vadd.f32 %v849, %v1011
    %v1048 = vadd.f32 %v854, %v1016
    %v1049 = vadd.f32 %v857, %v1019
    %v1050 = vadd.f32 %v862, %v1024
    %v1051 = vadd.f32 %v865, %v1027
    %v1052 = vadd.f32 %v870, %v1032
    %v1053 = vadd.f32 %v873, %v1035
    %v1054 = vrot.slane %v423, 1
    %v1055 = vrot.slane %v424, 1
    %v1056 = vrot.slane %v425, 1
    %v1057 = vrot.slane %v426, 1
    %v1058 = vrot.slane %v427, 1
    %v1059 = vrot.slane %v428, 1
    %v1060 = vrot.slane %v429, 1
    %v1061 = vrot.slane %v430, 1
    %v1062 = vrot.slane %v431, 1
    %v1063 = vrot.slane %v432, 1
    %v1064 = vrot.slane %v433, 1
    %v1065 = vrot.slane %v434, 1
    %v1066 = vrot.slane %v435, 1
    %v1067 = vrot.slane %v436, 1
    %v1068 = vrot.slane %v437, 1
    %v1069 = vrot.slane %v438, 1
    %vm1070 = vcmp.lt.s32.totalorder %v448, 7
    %v1071 = vsel %vm1070, %v1068, %v1069
    %v1072 = vsel %vm1070, %v1067, %v1068
    %v1073 = vsel %vm1070, %v1066, %v1067
    %v1074 = vsel %vm1070, %v1065, %v1066
    %v1075 = vsel %vm1070, %v1064, %v1065
    %v1076 = vsel %vm1070, %v1063, %v1064
    %v1077 = vsel %vm1070, %v1062, %v1063
    %v1078 = vsel %vm1070, %v1061, %v1062
    %v1079 = vsel %vm1070, %v1060, %v1061
    %v1080 = vsel %vm1070, %v1059, %v1060
    %v1081 = vsel %vm1070, %v1058, %v1059
    %v1082 = vsel %vm1070, %v1057, %v1058
    %v1083 = vsel %vm1070, %v1056, %v1057
    %v1084 = vsel %vm1070, %v1055, %v1056
    %v1085 = vsel %vm1070, %v1054, %v1055
    %v1086 = vsel %vm1070, %v1069, %v1054
    %vm1087 = vcmp.lt.s32.totalorder %v480, 7
    %vm1088 = vcmp.lt.s32.totalorder %v481, 7
    %vm1089 = vcmp.lt.s32.totalorder %v482, 7
    %vm1090 = vcmp.lt.s32.totalorder %v483, 7
    %vm1091 = vcmp.lt.s32.totalorder %v484, 7
    %vm1092 = vcmp.lt.s32.totalorder %v485, 7
    %vm1093 = vcmp.lt.s32.totalorder %v486, 7
    %vm1094 = vcmp.lt.s32.totalorder %v487, 7
    %vm1095 = vcmp.lt.s32.totalorder %v488, 7
    %vm1096 = vcmp.lt.s32.totalorder %v489, 7
    %vm1097 = vcmp.lt.s32.totalorder %v490, 7
    %vm1098 = vcmp.lt.s32.totalorder %v491, 7
    %vm1099 = vcmp.lt.s32.totalorder %v492, 7
    %vm1100 = vcmp.lt.s32.totalorder %v493, 7
    %vm1101 = vcmp.lt.s32.totalorder %v494, 7
    %vm1102 = vcmp.lt.s32.totalorder %v495, 7
    %vm1103 = vmand %vm534, %vm1087
    %vm1104 = vmand %vm535, %vm1088
    %vm1105 = vmand %vm536, %vm1089
    %vm1106 = vmand %vm537, %vm1090
    %vm1107 = vmand %vm538, %vm1091
    %vm1108 = vmand %vm539, %vm1092
    %vm1109 = vmand %vm540, %vm1093
    %vm1110 = vmand %vm541, %vm1094
    %vm1111 = vmand %vm542, %vm1095
    %vm1112 = vmand %vm543, %vm1096
    %vm1113 = vmand %vm544, %vm1097
    %vm1114 = vmand %vm545, %vm1098
    %vm1115 = vmand %vm546, %vm1099
    %vm1116 = vmand %vm547, %vm1100
    %vm1117 = vmand %vm548, %vm1101
    %vm1118 = vmand %vm549, %vm1102
    %v1119 = vsel %vm1103, %v1086, 0.0
    %v1120 = vsel %vm1104, %v1085, 0.0
    %v1121 = vsel %vm1105, %v1084, 0.0
    %v1122 = vsel %vm1106, %v1083, 0.0
    %v1123 = vsel %vm1107, %v1082, 0.0
    %v1124 = vsel %vm1108, %v1081, 0.0
    %v1125 = vsel %vm1109, %v1080, 0.0
    %v1126 = vsel %vm1110, %v1079, 0.0
    %v1127 = vsel %vm1111, %v1078, 0.0
    %v1128 = vsel %vm1112, %v1077, 0.0
    %v1129 = vsel %vm1113, %v1076, 0.0
    %v1130 = vsel %vm1114, %v1075, 0.0
    %v1131 = vsel %vm1115, %v1074, 0.0
    %v1132 = vsel %vm1116, %v1073, 0.0
    %v1133 = vsel %vm1117, %v1072, 0.0
    %v1134 = vsel %vm1118, %v1071, 0.0
    %v1135 = vpack.c.bf16 %v1120, %v1119
    %v1136 = vpack.c.bf16 %v1122, %v1121
    %v1137 = vpack.c.bf16 %v1124, %v1123
    %v1138 = vpack.c.bf16 %v1126, %v1125
    %v1139 = vpack.c.bf16 %v1128, %v1127
    %v1140 = vpack.c.bf16 %v1130, %v1129
    %v1141 = vpack.c.bf16 %v1132, %v1131
    %v1142 = vpack.c.bf16 %v1134, %v1133
    %s1143 = scalar_lea.vmem [#allocation5], 32
    %v1144 = vld [vmem:[%s1143] sm:$0xf]
    %v1145 = vld [vmem:[%s1143 + $0x4] sm:$0xf]
    %v1146 = vld [vmem:[%s1143 + $0x8] sm:$0xf]
    %v1147 = vld [vmem:[%s1143 + $0xc] sm:$0xf]
    %v1152 = vunpack.c.l.b16 %v1144
    %v1153 = vunpack.c.l.b16 %v1145
    %v1154 = vunpack.c.l.b16 %v1146
    %v1155 = vunpack.c.l.b16 %v1147
    %v1156 = vpack.c.b16 %v1153, %v1152
    %v1157 = vpack.c.b16 %v1155, %v1154
    %v1161 = vsel %vm252, %v1135, 0
    %v1164 = vsel %vm252, %v1136, 0
    %v1167 = vsel %vm252, %v1137, 0
    %v1170 = vsel %vm252, %v1138, 0
    %v1173 = vsel %vm252, %v1139, 0
    %v1176 = vsel %vm252, %v1140, 0
    %v1179 = vsel %vm252, %v1141, 0
    %v1182 = vsel %vm252, %v1142, 0
    %1184 = vmatprep.subr.bf16.mxu0 0
    %1185 = vmatpush1.bf16.msra.mxu0 %v1156
    %1186 = vmatprep.subr.bf16.mxu0 0
    %1187 = vmatpush1.bf16.msra.mxu0 %v1157
    %1188 = vmatprep.subr.bf16.mxu0 0
    %1189 = vmatpush1.bf16.msra.mxu0 0
    %1190 = vmatprep.subr.bf16.mxu0 0
    %1191 = vmatpush1.bf16.msra.mxu0 0
    %1192 = vmatprep.subr.bf16.mxu0 0
    %1193 = vmatpush1.bf16.msra.mxu0 0
    %1194 = vmatprep.subr.bf16.mxu0 0
    %1195 = vmatpush1.bf16.msra.mxu0 0
    %1196 = vmatprep.subr.bf16.mxu0 0
    %1197 = vmatpush1.bf16.msra.mxu0 0
    %1198 = vmatprep.subr.bf16.mxu0 0
    %1199 = vmatpush1.bf16.msra.mxu0 0
    %1200 = vmatprep.subr.bf16.mxu0 0
    %1201 = vmatpush1.bf16.msra.mxu0 0
    %1202 = vmatprep.subr.bf16.mxu0 0
    %1203 = vmatpush1.bf16.msra.mxu0 0
    %1204 = vmatprep.subr.bf16.mxu0 0
    %1205 = vmatpush1.bf16.msra.mxu0 0
    %1206 = vmatprep.subr.bf16.mxu0 0
    %1207 = vmatpush1.bf16.msra.mxu0 0
    %1208 = vmatprep.subr.bf16.mxu0 0
    %1209 = vmatpush1.bf16.msra.mxu0 0
    %1210 = vmatprep.subr.bf16.mxu0 0
    %1211 = vmatpush1.bf16.msra.mxu0 0
    %1212 = vmatprep.subr.bf16.mxu0 0
    %1213 = vmatpush1.bf16.msra.mxu0 0
    %1214 = vmatprep.subr.bf16.mxu0 0
    %1215 = vmatpush1.bf16.msra.mxu0 0
    %1216 = vmatprep.mubr.bf16.mxu0 0
    %1217 = vmatmul.mubr.bf16.gmra.mrb[0].mxu0 %v1161
    %v1218 = vpop.f32.mrb[0].mxu0
    %v1219 = vadd.f32 0.0, %v1218
    %v1220 = vpop.f32.mrb[0].mxu0
    %v1221 = vpop.f32.mrb[0].mxu0
    %v1222 = vadd.f32 0.0, %v1221
    %v1223 = vpop.f32.mrb[0].mxu0
    %1224 = vmatprep.mubr.bf16.mxu0 0
    %1225 = vmatmul.mubr.bf16.gmra.mrb[0].mxu0 %v1164
    %v1226 = vpop.f32.mrb[0].mxu0
    %v1227 = vadd.f32 0.0, %v1226
    %v1228 = vpop.f32.mrb[0].mxu0
    %v1229 = vpop.f32.mrb[0].mxu0
    %v1230 = vadd.f32 0.0, %v1229
    %v1231 = vpop.f32.mrb[0].mxu0
    %1232 = vmatprep.mubr.bf16.mxu0 0
    %1233 = vmatmul.mubr.bf16.gmra.mrb[0].mxu0 %v1167
    %v1234 = vpop.f32.mrb[0].mxu0
    %v1235 = vadd.f32 0.0, %v1234
    %v1236 = vpop.f32.mrb[0].mxu0
    %v1237 = vpop.f32.mrb[0].mxu0
    %v1238 = vadd.f32 0.0, %v1237
    %v1239 = vpop.f32.mrb[0].mxu0
    %1240 = vmatprep.mubr.bf16.mxu0 0
    %1241 = vmatmul.mubr.bf16.gmra.mrb[0].mxu0 %v1170
    %v1242 = vpop.f32.mrb[0].mxu0
    %v1243 = vadd.f32 0.0, %v1242
    %v1244 = vpop.f32.mrb[0].mxu0
    %v1245 = vpop.f32.mrb[0].mxu0
    %v1246 = vadd.f32 0.0, %v1245
    %v1247 = vpop.f32.mrb[0].mxu0
    %1248 = vmatprep.mubr.bf16.mxu0 0
    %1249 = vmatmul.mubr.bf16.gmra.mrb[0].mxu0 %v1173
    %v1250 = vpop.f32.mrb[0].mxu0
    %v1251 = vadd.f32 0.0, %v1250
    %v1252 = vpop.f32.mrb[0].mxu0
    %v1253 = vpop.f32.mrb[0].mxu0
    %v1254 = vadd.f32 0.0, %v1253
    %v1255 = vpop.f32.mrb[0].mxu0
    %1256 = vmatprep.mubr.bf16.mxu0 0
    %1257 = vmatmul.mubr.bf16.gmra.mrb[0].mxu0 %v1176
    %v1258 = vpop.f32.mrb[0].mxu0
    %v1259 = vadd.f32 0.0, %v1258
    %v1260 = vpop.f32.mrb[0].mxu0
    %v1261 = vpop.f32.mrb[0].mxu0
    %v1262 = vadd.f32 0.0, %v1261
    %v1263 = vpop.f32.mrb[0].mxu0
    %1264 = vmatprep.mubr.bf16.mxu0 0
    %1265 = vmatmul.mubr.bf16.gmra.mrb[0].mxu0 %v1179
    %v1266 = vpop.f32.mrb[0].mxu0
    %v1267 = vadd.f32 0.0, %v1266
    %v1268 = vpop.f32.mrb[0].mxu0
    %v1269 = vpop.f32.mrb[0].mxu0
    %v1270 = vadd.f32 0.0, %v1269
    %v1271 = vpop.f32.mrb[0].mxu0
    %1272 = vmatprep.mubr.bf16.mxu0 0
    %1273 = vmatmul.mubr.bf16.gmra.mrb[0].mxu0 %v1182
    %v1274 = vpop.f32.mrb[0].mxu0
    %v1275 = vadd.f32 0.0, %v1274
    %v1276 = vpop.f32.mrb[0].mxu0
    %v1277 = vpop.f32.mrb[0].mxu0
    %v1278 = vadd.f32 0.0, %v1277
    %v1279 = vpop.f32.mrb[0].mxu0
    %1280 = vdwg.mxu0
    %v1281 = vadd.f32 %v1038, %v1219
    %v1282 = vadd.f32 %v1039, %v1222
    %v1283 = vadd.f32 %v1040, %v1227
    %v1284 = vadd.f32 %v1041, %v1230
    %v1285 = vadd.f32 %v1042, %v1235
    %v1286 = vadd.f32 %v1043, %v1238
    %v1287 = vadd.f32 %v1044, %v1243
    %v1288 = vadd.f32 %v1045, %v1246
    %v1289 = vadd.f32 %v1046, %v1251
    %v1290 = vadd.f32 %v1047, %v1254
    %v1291 = vadd.f32 %v1048, %v1259
    %v1292 = vadd.f32 %v1049, %v1262
    %v1293 = vadd.f32 %v1050, %v1267
    %v1294 = vadd.f32 %v1051, %v1270
    %v1295 = vadd.f32 %v1052, %v1275
    %v1296 = vadd.f32 %v1053, %v1278
    %v1297 = vsel %vm550, %v533, 0.0
    %v1298 = vsel %vm551, %v532, 0.0
    %v1299 = vsel %vm552, %v531, 0.0
    %v1300 = vsel %vm553, %v530, 0.0
    %v1301 = vsel %vm554, %v529, 0.0
    %v1302 = vsel %vm555, %v528, 0.0
    %v1303 = vsel %vm556, %v527, 0.0
    %v1304 = vsel %vm557, %v526, 0.0
    %v1305 = vsel %vm558, %v525, 0.0
    %v1306 = vsel %vm559, %v524, 0.0
    %v1307 = vsel %vm560, %v523, 0.0
    %v1308 = vsel %vm561, %v522, 0.0
    %v1309 = vsel %vm562, %v521, 0.0
    %v1310 = vsel %vm563, %v520, 0.0
    %v1311 = vsel %vm564, %v519, 0.0
    %v1312 = vsel %vm565, %v518, 0.0
    %v1313 = vpack.c.bf16 %v1298, %v1297
    %v1314 = vpack.c.bf16 %v1300, %v1299
    %v1315 = vpack.c.bf16 %v1302, %v1301
    %v1316 = vpack.c.bf16 %v1304, %v1303
    %v1317 = vpack.c.bf16 %v1306, %v1305
    %v1318 = vpack.c.bf16 %v1308, %v1307
    %v1319 = vpack.c.bf16 %v1310, %v1309
    %v1320 = vpack.c.bf16 %v1312, %v1311
    %s1321 = scalar_lea.vmem [#allocation5], 48
    %v1322 = vld [vmem:[%s1321] sm:$0xf]
    %v1323 = vld [vmem:[%s1321 + $0x4] sm:$0xf]
    %v1324 = vld [vmem:[%s1321 + $0x8] sm:$0xf]
    %v1325 = vld [vmem:[%s1321 + $0xc] sm:$0xf]
    %v1330 = vunpack.c.l.b16 %v1322
    %v1331 = vunpack.c.l.b16 %v1323
    %v1332 = vunpack.c.l.b16 %v1324
    %v1333 = vunpack.c.l.b16 %v1325
    %v1334 = vpack.c.b16 %v1331, %v1330
    %v1335 = vpack.c.b16 %v1333, %v1332
    %v1339 = vsel %vm252, %v1313, 0
    %v1342 = vsel %vm252, %v1314, 0
    %v1345 = vsel %vm252, %v1315, 0
    %v1348 = vsel %vm252, %v1316, 0
    %v1351 = vsel %vm252, %v1317, 0
    %v1354 = vsel %vm252, %v1318, 0
    %v1357 = vsel %vm252, %v1319, 0
    %v1360 = vsel %vm252, %v1320, 0
    %1362 = vmatprep.subr.bf16.mxu0 0
    %1363 = vmatpush1.bf16.msra.mxu0 %v1334
    %1364 = vmatprep.subr.bf16.mxu0 0
    %1365 = vmatpush1.bf16.msra.mxu0 %v1335
    %1366 = vmatprep.subr.bf16.mxu0 0
    %1367 = vmatpush1.bf16.msra.mxu0 0
    %1368 = vmatprep.subr.bf16.mxu0 0
    %1369 = vmatpush1.bf16.msra.mxu0 0
    %1370 = vmatprep.subr.bf16.mxu0 0
    %1371 = vmatpush1.bf16.msra.mxu0 0
    %1372 = vmatprep.subr.bf16.mxu0 0
    %1373 = vmatpush1.bf16.msra.mxu0 0
    %1374 = vmatprep.subr.bf16.mxu0 0
    %1375 = vmatpush1.bf16.msra.mxu0 0
    %1376 = vmatprep.subr.bf16.mxu0 0
    %1377 = vmatpush1.bf16.msra.mxu0 0
    %1378 = vmatprep.subr.bf16.mxu0 0
    %1379 = vmatpush1.bf16.msra.mxu0 0
    %1380 = vmatprep.subr.bf16.mxu0 0
    %1381 = vmatpush1.bf16.msra.mxu0 0
    %1382 = vmatprep.subr.bf16.mxu0 0
    %1383 = vmatpush1.bf16.msra.mxu0 0
    %1384 = vmatprep.subr.bf16.mxu0 0
    %1385 = vmatpush1.bf16.msra.mxu0 0
    %1386 = vmatprep.subr.bf16.mxu0 0
    %1387 = vmatpush1.bf16.msra.mxu0 0
    %1388 = vmatprep.subr.bf16.mxu0 0
    %1389 = vmatpush1.bf16.msra.mxu0 0
    %1390 = vmatprep.subr.bf16.mxu0 0
    %1391 = vmatpush1.bf16.msra.mxu0 0
    %1392 = vmatprep.subr.bf16.mxu0 0
    %1393 = vmatpush1.bf16.msra.mxu0 0
    %1394 = vmatprep.mubr.bf16.mxu0 0
    %1395 = vmatmul.mubr.bf16.gmra.mrb[0].mxu0 %v1339
    %v1396 = vpop.f32.mrb[0].mxu0
    %v1397 = vadd.f32 0.0, %v1396
    %v1398 = vpop.f32.mrb[0].mxu0
    %v1399 = vpop.f32.mrb[0].mxu0
    %v1400 = vadd.f32 0.0, %v1399
    %v1401 = vpop.f32.mrb[0].mxu0
    %1402 = vmatprep.mubr.bf16.mxu0 0
    %1403 = vmatmul.mubr.bf16.gmra.mrb[0].mxu0 %v1342
    %v1404 = vpop.f32.mrb[0].mxu0
    %v1405 = vadd.f32 0.0, %v1404
    %v1406 = vpop.f32.mrb[0].mxu0
    %v1407 = vpop.f32.mrb[0].mxu0
    %v1408 = vadd.f32 0.0, %v1407
    %v1409 = vpop.f32.mrb[0].mxu0
    %1410 = vmatprep.mubr.bf16.mxu0 0
    %1411 = vmatmul.mubr.bf16.gmra.mrb[0].mxu0 %v1345
    %v1412 = vpop.f32.mrb[0].mxu0
    %v1413 = vadd.f32 0.0, %v1412
    %v1414 = vpop.f32.mrb[0].mxu0
    %v1415 = vpop.f32.mrb[0].mxu0
    %v1416 = vadd.f32 0.0, %v1415
    %v1417 = vpop.f32.mrb[0].mxu0
    %1418 = vmatprep.mubr.bf16.mxu0 0
    %1419 = vmatmul.mubr.bf16.gmra.mrb[0].mxu0 %v1348
    %v1420 = vpop.f32.mrb[0].mxu0
    %v1421 = vadd.f32 0.0, %v1420
    %v1422 = vpop.f32.mrb[0].mxu0
    %v1423 = vpop.f32.mrb[0].mxu0
    %v1424 = vadd.f32 0.0, %v1423
    %v1425 = vpop.f32.mrb[0].mxu0
    %1426 = vmatprep.mubr.bf16.mxu0 0
    %1427 = vmatmul.mubr.bf16.gmra.mrb[0].mxu0 %v1351
    %v1428 = vpop.f32.mrb[0].mxu0
    %v1429 = vadd.f32 0.0, %v1428
    %v1430 = vpop.f32.mrb[0].mxu0
    %v1431 = vpop.f32.mrb[0].mxu0
    %v1432 = vadd.f32 0.0, %v1431
    %v1433 = vpop.f32.mrb[0].mxu0
    %1434 = vmatprep.mubr.bf16.mxu0 0
    %1435 = vmatmul.mubr.bf16.gmra.mrb[0].mxu0 %v1354
    %v1436 = vpop.f32.mrb[0].mxu0
    %v1437 = vadd.f32 0.0, %v1436
    %v1438 = vpop.f32.mrb[0].mxu0
    %v1439 = vpop.f32.mrb[0].mxu0
    %v1440 = vadd.f32 0.0, %v1439
    %v1441 = vpop.f32.mrb[0].mxu0
    %1442 = vmatprep.mubr.bf16.mxu0 0
    %1443 = vmatmul.mubr.bf16.gmra.mrb[0].mxu0 %v1357
    %v1444 = vpop.f32.mrb[0].mxu0
    %v1445 = vadd.f32 0.0, %v1444
    %v1446 = vpop.f32.mrb[0].mxu0
    %v1447 = vpop.f32.mrb[0].mxu0
    %v1448 = vadd.f32 0.0, %v1447
    %v1449 = vpop.f32.mrb[0].mxu0
    %1450 = vmatprep.mubr.bf16.mxu0 0
    %1451 = vmatmul.mubr.bf16.gmra.mrb[0].mxu0 %v1360
    %v1452 = vpop.f32.mrb[0].mxu0
    %v1453 = vadd.f32 0.0, %v1452
    %v1454 = vpop.f32.mrb[0].mxu0
    %v1455 = vpop.f32.mrb[0].mxu0
    %v1456 = vadd.f32 0.0, %v1455
    %v1457 = vpop.f32.mrb[0].mxu0
    %1458 = vdwg.mxu0
    %v1459 = vadd.f32 %v1281, %v1397
    %v1460 = vadd.f32 %v1282, %v1400
    %v1461 = vadd.f32 %v1283, %v1405
    %v1462 = vadd.f32 %v1284, %v1408
    %v1463 = vadd.f32 %v1285, %v1413
    %v1464 = vadd.f32 %v1286, %v1416
    %v1465 = vadd.f32 %v1287, %v1421
    %v1466 = vadd.f32 %v1288, %v1424
    %v1467 = vadd.f32 %v1289, %v1429
    %v1468 = vadd.f32 %v1290, %v1432
    %v1469 = vadd.f32 %v1291, %v1437
    %v1470 = vadd.f32 %v1292, %v1440
    %v1471 = vadd.f32 %v1293, %v1445
    %v1472 = vadd.f32 %v1294, %v1448
    %v1473 = vadd.f32 %v1295, %v1453
    %v1474 = vadd.f32 %v1296, %v1456
    %v1475 = vsel %vm1087, %v1085, 0.0
    %v1476 = vsel %vm1088, %v1084, 0.0
    %v1477 = vsel %vm1089, %v1083, 0.0
    %v1478 = vsel %vm1090, %v1082, 0.0
    %v1479 = vsel %vm1091, %v1081, 0.0
    %v1480 = vsel %vm1092, %v1080, 0.0
    %v1481 = vsel %vm1093, %v1079, 0.0
    %v1482 = vsel %vm1094, %v1078, 0.0
    %v1483 = vsel %vm1095, %v1077, 0.0
    %v1484 = vsel %vm1096, %v1076, 0.0
    %v1485 = vsel %vm1097, %v1075, 0.0
    %v1486 = vsel %vm1098, %v1074, 0.0
    %v1487 = vsel %vm1099, %v1073, 0.0
    %v1488 = vsel %vm1100, %v1072, 0.0
    %v1489 = vsel %vm1101, %v1071, 0.0
    %v1490 = vsel %vm1102, %v1086, 0.0
    %v1491 = vpack.c.bf16 %v1476, %v1475
    %v1492 = vpack.c.bf16 %v1478, %v1477
    %v1493 = vpack.c.bf16 %v1480, %v1479
    %v1494 = vpack.c.bf16 %v1482, %v1481
    %v1495 = vpack.c.bf16 %v1484, %v1483
    %v1496 = vpack.c.bf16 %v1486, %v1485
    %v1497 = vpack.c.bf16 %v1488, %v1487
    %v1498 = vpack.c.bf16 %v1490, %v1489
    %s1499 = scalar_lea.vmem [#allocation5], 80
    %v1500 = vld [vmem:[%s1499] sm:$0xf]
    %v1501 = vld [vmem:[%s1499 + $0x4] sm:$0xf]
    %v1502 = vld [vmem:[%s1499 + $0x8] sm:$0xf]
    %v1503 = vld [vmem:[%s1499 + $0xc] sm:$0xf]
    %v1508 = vunpack.c.l.b16 %v1500
    %v1509 = vunpack.c.l.b16 %v1501
    %v1510 = vunpack.c.l.b16 %v1502
    %v1511 = vunpack.c.l.b16 %v1503
    %v1512 = vpack.c.b16 %v1509, %v1508
    %v1513 = vpack.c.b16 %v1511, %v1510
    %v1517 = vsel %vm252, %v1491, 0
    %v1520 = vsel %vm252, %v1492, 0
    %v1523 = vsel %vm252, %v1493, 0
    %v1526 = vsel %vm252, %v1494, 0
    %v1529 = vsel %vm252, %v1495, 0
    %v1532 = vsel %vm252, %v1496, 0
    %v1535 = vsel %vm252, %v1497, 0
    %v1538 = vsel %vm252, %v1498, 0
    %1540 = vmatprep.subr.bf16.mxu0 0
    %1541 = vmatpush1.bf16.msra.mxu0 %v1512
    %1542 = vmatprep.subr.bf16.mxu0 0
    %1543 = vmatpush1.bf16.msra.mxu0 %v1513
    %1544 = vmatprep.subr.bf16.mxu0 0
    %1545 = vmatpush1.bf16.msra.mxu0 0
    %1546 = vmatprep.subr.bf16.mxu0 0
    %1547 = vmatpush1.bf16.msra.mxu0 0
    %1548 = vmatprep.subr.bf16.mxu0 0
    %1549 = vmatpush1.bf16.msra.mxu0 0
    %1550 = vmatprep.subr.bf16.mxu0 0
    %1551 = vmatpush1.bf16.msra.mxu0 0
    %1552 = vmatprep.subr.bf16.mxu0 0
    %1553 = vmatpush1.bf16.msra.mxu0 0
    %1554 = vmatprep.subr.bf16.mxu0 0
    %1555 = vmatpush1.bf16.msra.mxu0 0
    %1556 = vmatprep.subr.bf16.mxu0 0
    %1557 = vmatpush1.bf16.msra.mxu0 0
    %1558 = vmatprep.subr.bf16.mxu0 0
    %1559 = vmatpush1.bf16.msra.mxu0 0
    %1560 = vmatprep.subr.bf16.mxu0 0
    %1561 = vmatpush1.bf16.msra.mxu0 0
    %1562 = vmatprep.subr.bf16.mxu0 0
    %1563 = vmatpush1.bf16.msra.mxu0 0
    %1564 = vmatprep.subr.bf16.mxu0 0
    %1565 = vmatpush1.bf16.msra.mxu0 0
    %1566 = vmatprep.subr.bf16.mxu0 0
    %1567 = vmatpush1.bf16.msra.mxu0 0
    %1568 = vmatprep.subr.bf16.mxu0 0
    %1569 = vmatpush1.bf16.msra.mxu0 0
    %1570 = vmatprep.subr.bf16.mxu0 0
    %1571 = vmatpush1.bf16.msra.mxu0 0
    %1572 = vmatprep.mubr.bf16.mxu0 0
    %1573 = vmatmul.mubr.bf16.gmra.mrb[0].mxu0 %v1517
    %v1574 = vpop.f32.mrb[0].mxu0
    %v1575 = vadd.f32 0.0, %v1574
    %v1576 = vpop.f32.mrb[0].mxu0
    %v1577 = vpop.f32.mrb[0].mxu0
    %v1578 = vadd.f32 0.0, %v1577
    %v1579 = vpop.f32.mrb[0].mxu0
    %1580 = vmatprep.mubr.bf16.mxu0 0
    %1581 = vmatmul.mubr.bf16.gmra.mrb[0].mxu0 %v1520
    %v1582 = vpop.f32.mrb[0].mxu0
    %v1583 = vadd.f32 0.0, %v1582
    %v1584 = vpop.f32.mrb[0].mxu0
    %v1585 = vpop.f32.mrb[0].mxu0
    %v1586 = vadd.f32 0.0, %v1585
    %v1587 = vpop.f32.mrb[0].mxu0
    %1588 = vmatprep.mubr.bf16.mxu0 0
    %1589 = vmatmul.mubr.bf16.gmra.mrb[0].mxu0 %v1523
    %v1590 = vpop.f32.mrb[0].mxu0
    %v1591 = vadd.f32 0.0, %v1590
    %v1592 = vpop.f32.mrb[0].mxu0
    %v1593 = vpop.f32.mrb[0].mxu0
    %v1594 = vadd.f32 0.0, %v1593
    %v1595 = vpop.f32.mrb[0].mxu0
    %1596 = vmatprep.mubr.bf16.mxu0 0
    %1597 = vmatmul.mubr.bf16.gmra.mrb[0].mxu0 %v1526
    %v1598 = vpop.f32.mrb[0].mxu0
    %v1599 = vadd.f32 0.0, %v1598
    %v1600 = vpop.f32.mrb[0].mxu0
    %v1601 = vpop.f32.mrb[0].mxu0
    %v1602 = vadd.f32 0.0, %v1601
    %v1603 = vpop.f32.mrb[0].mxu0
    %1604 = vmatprep.mubr.bf16.mxu0 0
    %1605 = vmatmul.mubr.bf16.gmra.mrb[0].mxu0 %v1529
    %v1606 = vpop.f32.mrb[0].mxu0
    %v1607 = vadd.f32 0.0, %v1606
    %v1608 = vpop.f32.mrb[0].mxu0
    %v1609 = vpop.f32.mrb[0].mxu0
    %v1610 = vadd.f32 0.0, %v1609
    %v1611 = vpop.f32.mrb[0].mxu0
    %1612 = vmatprep.mubr.bf16.mxu0 0
    %1613 = vmatmul.mubr.bf16.gmra.mrb[0].mxu0 %v1532
    %v1614 = vpop.f32.mrb[0].mxu0
    %v1615 = vadd.f32 0.0, %v1614
    %v1616 = vpop.f32.mrb[0].mxu0
    %v1617 = vpop.f32.mrb[0].mxu0
    %v1618 = vadd.f32 0.0, %v1617
    %v1619 = vpop.f32.mrb[0].mxu0
    %1620 = vmatprep.mubr.bf16.mxu0 0
    %1621 = vmatmul.mubr.bf16.gmra.mrb[0].mxu0 %v1535
    %v1622 = vpop.f32.mrb[0].mxu0
    %v1623 = vadd.f32 0.0, %v1622
    %v1624 = vpop.f32.mrb[0].mxu0
    %v1625 = vpop.f32.mrb[0].mxu0
    %v1626 = vadd.f32 0.0, %v1625
    %v1627 = vpop.f32.mrb[0].mxu0
    %1628 = vmatprep.mubr.bf16.mxu0 0
    %1629 = vmatmul.mubr.bf16.gmra.mrb[0].mxu0 %v1538
    %v1630 = vpop.f32.mrb[0].mxu0
    %v1631 = vadd.f32 0.0, %v1630
    %v1632 = vpop.f32.mrb[0].mxu0
    %v1633 = vpop.f32.mrb[0].mxu0
    %v1634 = vadd.f32 0.0, %v1633
    %v1635 = vpop.f32.mrb[0].mxu0
    %1636 = vdwg.mxu0
    %v1637 = vadd.f32 %v1459, %v1575
    %v1638 = vadd.f32 %v1460, %v1578
    %v1639 = vadd.f32 %v1461, %v1583
    %v1640 = vadd.f32 %v1462, %v1586
    %v1641 = vadd.f32 %v1463, %v1591
    %v1642 = vadd.f32 %v1464, %v1594
    %v1643 = vadd.f32 %v1465, %v1599
    %v1644 = vadd.f32 %v1466, %v1602
    %v1645 = vadd.f32 %v1467, %v1607
    %v1646 = vadd.f32 %v1468, %v1610
    %v1647 = vadd.f32 %v1469, %v1615
    %v1648 = vadd.f32 %v1470, %v1618
    %v1649 = vadd.f32 %v1471, %v1623
    %v1650 = vadd.f32 %v1472, %v1626
    %v1651 = vadd.f32 %v1473, %v1631
    %v1652 = vadd.f32 %v1474, %v1634
    %vm1653 = vcmp.lt.s32.totalorder %v464, 56
    %vm1654 = vcmp.lt.s32.totalorder %v465, 56
    %vm1655 = vcmp.lt.s32.totalorder %v466, 56
    %vm1656 = vcmp.lt.s32.totalorder %v467, 56
    %vm1657 = vcmp.lt.s32.totalorder %v468, 56
    %vm1658 = vcmp.lt.s32.totalorder %v469, 56
    %vm1659 = vcmp.lt.s32.totalorder %v470, 56
    %vm1660 = vcmp.lt.s32.totalorder %v471, 56
    %vm1661 = vcmp.lt.s32.totalorder %v472, 56
    %vm1662 = vcmp.lt.s32.totalorder %v473, 56
    %vm1663 = vcmp.lt.s32.totalorder %v474, 56
    %vm1664 = vcmp.lt.s32.totalorder %v475, 56
    %vm1665 = vcmp.lt.s32.totalorder %v476, 56
    %vm1666 = vcmp.lt.s32.totalorder %v477, 56
    %vm1667 = vcmp.lt.s32.totalorder %v478, 56
    %vm1668 = vcmp.lt.s32.totalorder %v479, 56
    %vm1669 = vmand %vm1653, %vm550
    %vm1670 = vmand %vm1654, %vm551
    %vm1671 = vmand %vm1655, %vm552
    %vm1672 = vmand %vm1656, %vm553
    %vm1673 = vmand %vm1657, %vm554
    %vm1674 = vmand %vm1658, %vm555
    %vm1675 = vmand %vm1659, %vm556
    %vm1676 = vmand %vm1660, %vm557
    %vm1677 = vmand %vm1661, %vm558
    %vm1678 = vmand %vm1662, %vm559
    %vm1679 = vmand %vm1663, %vm560
    %vm1680 = vmand %vm1664, %vm561
    %vm1681 = vmand %vm1665, %vm562
    %vm1682 = vmand %vm1666, %vm563
    %vm1683 = vmand %vm1667, %vm564
    %vm1684 = vmand %vm1668, %vm565
    %v1685 = vsel %vm1669, %v532, 0.0
    %v1686 = vsel %vm1670, %v531, 0.0
    %v1687 = vsel %vm1671, %v530, 0.0
    %v1688 = vsel %vm1672, %v529, 0.0
    %v1689 = vsel %vm1673, %v528, 0.0
    %v1690 = vsel %vm1674, %v527, 0.0
    %v1691 = vsel %vm1675, %v526, 0.0
    %v1692 = vsel %vm1676, %v525, 0.0
    %v1693 = vsel %vm1677, %v524, 0.0
    %v1694 = vsel %vm1678, %v523, 0.0
    %v1695 = vsel %vm1679, %v522, 0.0
    %v1696 = vsel %vm1680, %v521, 0.0
    %v1697 = vsel %vm1681, %v520, 0.0
    %v1698 = vsel %vm1682, %v519, 0.0
    %v1699 = vsel %vm1683, %v518, 0.0
    %v1700 = vsel %vm1684, %v533, 0.0
    %v1701 = vpack.c.bf16 %v1686, %v1685
    %v1702 = vpack.c.bf16 %v1688, %v1687
    %v1703 = vpack.c.bf16 %v1690, %v1689
    %v1704 = vpack.c.bf16 %v1692, %v1691
    %v1705 = vpack.c.bf16 %v1694, %v1693
    %v1706 = vpack.c.bf16 %v1696, %v1695
    %v1707 = vpack.c.bf16 %v1698, %v1697
    %v1708 = vpack.c.bf16 %v1700, %v1699
    %s1709 = scalar_lea.vmem [#allocation5], 96
    %v1710 = vld [vmem:[%s1709] sm:$0xf]
    %v1711 = vld [vmem:[%s1709 + $0x4] sm:$0xf]
    %v1712 = vld [vmem:[%s1709 + $0x8] sm:$0xf]
    %v1713 = vld [vmem:[%s1709 + $0xc] sm:$0xf]
    %v1718 = vunpack.c.l.b16 %v1710
    %v1719 = vunpack.c.l.b16 %v1711
    %v1720 = vunpack.c.l.b16 %v1712
    %v1721 = vunpack.c.l.b16 %v1713
    %v1722 = vpack.c.b16 %v1719, %v1718
    %v1723 = vpack.c.b16 %v1721, %v1720
    %v1727 = vsel %vm252, %v1701, 0
    %v1730 = vsel %vm252, %v1702, 0
    %v1733 = vsel %vm252, %v1703, 0
    %v1736 = vsel %vm252, %v1704, 0
    %v1739 = vsel %vm252, %v1705, 0
    %v1742 = vsel %vm252, %v1706, 0
    %v1745 = vsel %vm252, %v1707, 0
    %v1748 = vsel %vm252, %v1708, 0
    %1750 = vmatprep.subr.bf16.mxu0 0
    %1751 = vmatpush1.bf16.msra.mxu0 %v1722
    %1752 = vmatprep.subr.bf16.mxu0 0
    %1753 = vmatpush1.bf16.msra.mxu0 %v1723
    %1754 = vmatprep.subr.bf16.mxu0 0
    %1755 = vmatpush1.bf16.msra.mxu0 0
    %1756 = vmatprep.subr.bf16.mxu0 0
    %1757 = vmatpush1.bf16.msra.mxu0 0
    %1758 = vmatprep.subr.bf16.mxu0 0
    %1759 = vmatpush1.bf16.msra.mxu0 0
    %1760 = vmatprep.subr.bf16.mxu0 0
    %1761 = vmatpush1.bf16.msra.mxu0 0
    %1762 = vmatprep.subr.bf16.mxu0 0
    %1763 = vmatpush1.bf16.msra.mxu0 0
    %1764 = vmatprep.subr.bf16.mxu0 0
    %1765 = vmatpush1.bf16.msra.mxu0 0
    %1766 = vmatprep.subr.bf16.mxu0 0
    %1767 = vmatpush1.bf16.msra.mxu0 0
    %1768 = vmatprep.subr.bf16.mxu0 0
    %1769 = vmatpush1.bf16.msra.mxu0 0
    %1770 = vmatprep.subr.bf16.mxu0 0
    %1771 = vmatpush1.bf16.msra.mxu0 0
    %1772 = vmatprep.subr.bf16.mxu0 0
    %1773 = vmatpush1.bf16.msra.mxu0 0
    %1774 = vmatprep.subr.bf16.mxu0 0
    %1775 = vmatpush1.bf16.msra.mxu0 0
    %1776 = vmatprep.subr.bf16.mxu0 0
    %1777 = vmatpush1.bf16.msra.mxu0 0
    %1778 = vmatprep.subr.bf16.mxu0 0
    %1779 = vmatpush1.bf16.msra.mxu0 0
    %1780 = vmatprep.subr.bf16.mxu0 0
    %1781 = vmatpush1.bf16.msra.mxu0 0
    %1782 = vmatprep.mubr.bf16.mxu0 0
    %1783 = vmatmul.mubr.bf16.gmra.mrb[0].mxu0 %v1727
    %v1784 = vpop.f32.mrb[0].mxu0
    %v1785 = vadd.f32 0.0, %v1784
    %v1786 = vpop.f32.mrb[0].mxu0
    %v1787 = vpop.f32.mrb[0].mxu0
    %v1788 = vadd.f32 0.0, %v1787
    %v1789 = vpop.f32.mrb[0].mxu0
    %1790 = vmatprep.mubr.bf16.mxu0 0
    %1791 = vmatmul.mubr.bf16.gmra.mrb[0].mxu0 %v1730
    %v1792 = vpop.f32.mrb[0].mxu0
    %v1793 = vadd.f32 0.0, %v1792
    %v1794 = vpop.f32.mrb[0].mxu0
    %v1795 = vpop.f32.mrb[0].mxu0
    %v1796 = vadd.f32 0.0, %v1795
    %v1797 = vpop.f32.mrb[0].mxu0
    %1798 = vmatprep.mubr.bf16.mxu0 0
    %1799 = vmatmul.mubr.bf16.gmra.mrb[0].mxu0 %v1733
    %v1800 = vpop.f32.mrb[0].mxu0
    %v1801 = vadd.f32 0.0, %v1800
    %v1802 = vpop.f32.mrb[0].mxu0
    %v1803 = vpop.f32.mrb[0].mxu0
    %v1804 = vadd.f32 0.0, %v1803
    %v1805 = vpop.f32.mrb[0].mxu0
    %1806 = vmatprep.mubr.bf16.mxu0 0
    %1807 = vmatmul.mubr.bf16.gmra.mrb[0].mxu0 %v1736
    %v1808 = vpop.f32.mrb[0].mxu0
    %v1809 = vadd.f32 0.0, %v1808
    %v1810 = vpop.f32.mrb[0].mxu0
    %v1811 = vpop.f32.mrb[0].mxu0
    %v1812 = vadd.f32 0.0, %v1811
    %v1813 = vpop.f32.mrb[0].mxu0
    %1814 = vmatprep.mubr.bf16.mxu0 0
    %1815 = vmatmul.mubr.bf16.gmra.mrb[0].mxu0 %v1739
    %v1816 = vpop.f32.mrb[0].mxu0
    %v1817 = vadd.f32 0.0, %v1816
    %v1818 = vpop.f32.mrb[0].mxu0
    %v1819 = vpop.f32.mrb[0].mxu0
    %v1820 = vadd.f32 0.0, %v1819
    %v1821 = vpop.f32.mrb[0].mxu0
    %1822 = vmatprep.mubr.bf16.mxu0 0
    %1823 = vmatmul.mubr.bf16.gmra.mrb[0].mxu0 %v1742
    %v1824 = vpop.f32.mrb[0].mxu0
    %v1825 = vadd.f32 0.0, %v1824
    %v1826 = vpop.f32.mrb[0].mxu0
    %v1827 = vpop.f32.mrb[0].mxu0
    %v1828 = vadd.f32 0.0, %v1827
    %v1829 = vpop.f32.mrb[0].mxu0
    %1830 = vmatprep.mubr.bf16.mxu0 0
    %1831 = vmatmul.mubr.bf16.gmra.mrb[0].mxu0 %v1745
    %v1832 = vpop.f32.mrb[0].mxu0
    %v1833 = vadd.f32 0.0, %v1832
    %v1834 = vpop.f32.mrb[0].mxu0
    %v1835 = vpop.f32.mrb[0].mxu0
    %v1836 = vadd.f32 0.0, %v1835
    %v1837 = vpop.f32.mrb[0].mxu0
    %1838 = vmatprep.mubr.bf16.mxu0 0
    %1839 = vmatmul.mubr.bf16.gmra.mrb[0].mxu0 %v1748
    %v1840 = vpop.f32.mrb[0].mxu0
    %v1841 = vadd.f32 0.0, %v1840
    %v1842 = vpop.f32.mrb[0].mxu0
    %v1843 = vpop.f32.mrb[0].mxu0
    %v1844 = vadd.f32 0.0, %v1843
    %v1845 = vpop.f32.mrb[0].mxu0
    %1846 = vdwg.mxu0
    %v1847 = vadd.f32 %v1637, %v1785
    %v1848 = vadd.f32 %v1638, %v1788
    %v1849 = vadd.f32 %v1639, %v1793
    %v1850 = vadd.f32 %v1640, %v1796
    %v1851 = vadd.f32 %v1641, %v1801
    %v1852 = vadd.f32 %v1642, %v1804
    %v1853 = vadd.f32 %v1643, %v1809
    %v1854 = vadd.f32 %v1644, %v1812
    %v1855 = vadd.f32 %v1645, %v1817
    %v1856 = vadd.f32 %v1646, %v1820
    %v1857 = vadd.f32 %v1647, %v1825
    %v1858 = vadd.f32 %v1648, %v1828
    %v1859 = vadd.f32 %v1649, %v1833
    %v1860 = vadd.f32 %v1650, %v1836
    %v1861 = vadd.f32 %v1651, %v1841
    %v1862 = vadd.f32 %v1652, %v1844
    %v1863 = vsel %vm1653, %v424, 0.0
    %v1864 = vsel %vm1654, %v425, 0.0
    %v1865 = vsel %vm1655, %v426, 0.0
    %v1866 = vsel %vm1656, %v427, 0.0
    %v1867 = vsel %vm1657, %v428, 0.0
    %v1868 = vsel %vm1658, %v429, 0.0
    %v1869 = vsel %vm1659, %v430, 0.0
    %v1870 = vsel %vm1660, %v431, 0.0
    %v1871 = vsel %vm1661, %v432, 0.0
    %v1872 = vsel %vm1662, %v433, 0.0
    %v1873 = vsel %vm1663, %v434, 0.0
    %v1874 = vsel %vm1664, %v435, 0.0
    %v1875 = vsel %vm1665, %v436, 0.0
    %v1876 = vsel %vm1666, %v437, 0.0
    %v1877 = vsel %vm1667, %v438, 0.0
    %v1878 = vsel %vm1668, %v423, 0.0
    %v1879 = vpack.c.bf16 %v1864, %v1863
    %v1880 = vpack.c.bf16 %v1866, %v1865
    %v1881 = vpack.c.bf16 %v1868, %v1867
    %v1882 = vpack.c.bf16 %v1870, %v1869
    %v1883 = vpack.c.bf16 %v1872, %v1871
    %v1884 = vpack.c.bf16 %v1874, %v1873
    %v1885 = vpack.c.bf16 %v1876, %v1875
    %v1886 = vpack.c.bf16 %v1878, %v1877
    %s1887 = scalar_lea.vmem [#allocation5], 112
    %v1888 = vld [vmem:[%s1887] sm:$0xf]
    %v1889 = vld [vmem:[%s1887 + $0x4] sm:$0xf]
    %v1890 = vld [vmem:[%s1887 + $0x8] sm:$0xf]
    %v1891 = vld [vmem:[%s1887 + $0xc] sm:$0xf]
    %v1896 = vunpack.c.l.b16 %v1888
    %v1897 = vunpack.c.l.b16 %v1889
    %v1898 = vunpack.c.l.b16 %v1890
    %v1899 = vunpack.c.l.b16 %v1891
    %v1900 = vpack.c.b16 %v1897, %v1896
    %v1901 = vpack.c.b16 %v1899, %v1898
    %v1905 = vsel %vm252, %v1879, 0
    %v1908 = vsel %vm252, %v1880, 0
    %v1911 = vsel %vm252, %v1881, 0
    %v1914 = vsel %vm252, %v1882, 0
    %v1917 = vsel %vm252, %v1883, 0
    %v1920 = vsel %vm252, %v1884, 0
    %v1923 = vsel %vm252, %v1885, 0
    %v1926 = vsel %vm252, %v1886, 0
    %1928 = vmatprep.subr.bf16.mxu0 0
    %1929 = vmatpush1.bf16.msra.mxu0 %v1900
    %1930 = vmatprep.subr.bf16.mxu0 0
    %1931 = vmatpush1.bf16.msra.mxu0 %v1901
    %1932 = vmatprep.subr.bf16.mxu0 0
    %1933 = vmatpush1.bf16.msra.mxu0 0
    %1934 = vmatprep.subr.bf16.mxu0 0
    %1935 = vmatpush1.bf16.msra.mxu0 0
    %1936 = vmatprep.subr.bf16.mxu0 0
    %1937 = vmatpush1.bf16.msra.mxu0 0
    %1938 = vmatprep.subr.bf16.mxu0 0
    %1939 = vmatpush1.bf16.msra.mxu0 0
    %1940 = vmatprep.subr.bf16.mxu0 0
    %1941 = vmatpush1.bf16.msra.mxu0 0
    %1942 = vmatprep.subr.bf16.mxu0 0
    %1943 = vmatpush1.bf16.msra.mxu0 0
    %1944 = vmatprep.subr.bf16.mxu0 0
    %1945 = vmatpush1.bf16.msra.mxu0 0
    %1946 = vmatprep.subr.bf16.mxu0 0
    %1947 = vmatpush1.bf16.msra.mxu0 0
    %1948 = vmatprep.subr.bf16.mxu0 0
    %1949 = vmatpush1.bf16.msra.mxu0 0
    %1950 = vmatprep.subr.bf16.mxu0 0
    %1951 = vmatpush1.bf16.msra.mxu0 0
    %1952 = vmatprep.subr.bf16.mxu0 0
    %1953 = vmatpush1.bf16.msra.mxu0 0
    %1954 = vmatprep.subr.bf16.mxu0 0
    %1955 = vmatpush1.bf16.msra.mxu0 0
    %1956 = vmatprep.subr.bf16.mxu0 0
    %1957 = vmatpush1.bf16.msra.mxu0 0
    %1958 = vmatprep.subr.bf16.mxu0 0
    %1959 = vmatpush1.bf16.msra.mxu0 0
    %1960 = vmatprep.mubr.bf16.mxu0 0
    %1961 = vmatmul.mubr.bf16.gmra.mrb[0].mxu0 %v1905
    %v1962 = vpop.f32.mrb[0].mxu0
    %v1963 = vadd.f32 0.0, %v1962
    %v1964 = vpop.f32.mrb[0].mxu0
    %v1965 = vpop.f32.mrb[0].mxu0
    %v1966 = vadd.f32 0.0, %v1965
    %v1967 = vpop.f32.mrb[0].mxu0
    %1968 = vmatprep.mubr.bf16.mxu0 0
    %1969 = vmatmul.mubr.bf16.gmra.mrb[0].mxu0 %v1908
    %v1970 = vpop.f32.mrb[0].mxu0
    %v1971 = vadd.f32 0.0, %v1970
    %v1972 = vpop.f32.mrb[0].mxu0
    %v1973 = vpop.f32.mrb[0].mxu0
    %v1974 = vadd.f32 0.0, %v1973
    %v1975 = vpop.f32.mrb[0].mxu0
    %1976 = vmatprep.mubr.bf16.mxu0 0
    %1977 = vmatmul.mubr.bf16.gmra.mrb[0].mxu0 %v1911
    %v1978 = vpop.f32.mrb[0].mxu0
    %v1979 = vadd.f32 0.0, %v1978
    %v1980 = vpop.f32.mrb[0].mxu0
    %v1981 = vpop.f32.mrb[0].mxu0
    %v1982 = vadd.f32 0.0, %v1981
    %v1983 = vpop.f32.mrb[0].mxu0
    %1984 = vmatprep.mubr.bf16.mxu0 0
    %1985 = vmatmul.mubr.bf16.gmra.mrb[0].mxu0 %v1914
    %v1986 = vpop.f32.mrb[0].mxu0
    %v1987 = vadd.f32 0.0, %v1986
    %v1988 = vpop.f32.mrb[0].mxu0
    %v1989 = vpop.f32.mrb[0].mxu0
    %v1990 = vadd.f32 0.0, %v1989
    %v1991 = vpop.f32.mrb[0].mxu0
    %1992 = vmatprep.mubr.bf16.mxu0 0
    %1993 = vmatmul.mubr.bf16.gmra.mrb[0].mxu0 %v1917
    %v1994 = vpop.f32.mrb[0].mxu0
    %v1995 = vadd.f32 0.0, %v1994
    %v1996 = vpop.f32.mrb[0].mxu0
    %v1997 = vpop.f32.mrb[0].mxu0
    %v1998 = vadd.f32 0.0, %v1997
    %v1999 = vpop.f32.mrb[0].mxu0
    %2000 = vmatprep.mubr.bf16.mxu0 0
    %2001 = vmatmul.mubr.bf16.gmra.mrb[0].mxu0 %v1920
    %v2002 = vpop.f32.mrb[0].mxu0
    %v2003 = vadd.f32 0.0, %v2002
    %v2004 = vpop.f32.mrb[0].mxu0
    %v2005 = vpop.f32.mrb[0].mxu0
    %v2006 = vadd.f32 0.0, %v2005
    %v2007 = vpop.f32.mrb[0].mxu0
    %2008 = vmatprep.mubr.bf16.mxu0 0
    %2009 = vmatmul.mubr.bf16.gmra.mrb[0].mxu0 %v1923
    %v2010 = vpop.f32.mrb[0].mxu0
    %v2011 = vadd.f32 0.0, %v2010
    %v2012 = vpop.f32.mrb[0].mxu0
    %v2013 = vpop.f32.mrb[0].mxu0
    %v2014 = vadd.f32 0.0, %v2013
    %v2015 = vpop.f32.mrb[0].mxu0
    %2016 = vmatprep.mubr.bf16.mxu0 0
    %2017 = vmatmul.mubr.bf16.gmra.mrb[0].mxu0 %v1926
    %v2018 = vpop.f32.mrb[0].mxu0
    %v2019 = vadd.f32 0.0, %v2018
    %v2020 = vpop.f32.mrb[0].mxu0
    %v2021 = vpop.f32.mrb[0].mxu0
    %v2022 = vadd.f32 0.0, %v2021
    %v2023 = vpop.f32.mrb[0].mxu0
    %2024 = vdwg.mxu0
    %v2025 = vadd.f32 %v1847, %v1963
    %v2026 = vadd.f32 %v1848, %v1966
    %v2027 = vadd.f32 %v1849, %v1971
    %v2028 = vadd.f32 %v1850, %v1974
    %v2029 = vadd.f32 %v1851, %v1979
    %v2030 = vadd.f32 %v1852, %v1982
    %v2031 = vadd.f32 %v1853, %v1987
    %v2032 = vadd.f32 %v1854, %v1990
    %v2033 = vadd.f32 %v1855, %v1995
    %v2034 = vadd.f32 %v1856, %v1998
    %v2035 = vadd.f32 %v1857, %v2003
    %v2036 = vadd.f32 %v1858, %v2006
    %v2037 = vadd.f32 %v1859, %v2011
    %v2038 = vadd.f32 %v1860, %v2014
    %v2039 = vadd.f32 %v1861, %v2019
    %v2040 = vadd.f32 %v1862, %v2022
    %vm2041 = vmand %vm1653, %vm1087
    %vm2042 = vmand %vm1654, %vm1088
    %vm2043 = vmand %vm1655, %vm1089
    %vm2044 = vmand %vm1656, %vm1090
    %vm2045 = vmand %vm1657, %vm1091
    %vm2046 = vmand %vm1658, %vm1092
    %vm2047 = vmand %vm1659, %vm1093
    %vm2048 = vmand %vm1660, %vm1094
    %vm2049 = vmand %vm1661, %vm1095
    %vm2050 = vmand %vm1662, %vm1096
    %vm2051 = vmand %vm1663, %vm1097
    %vm2052 = vmand %vm1664, %vm1098
    %vm2053 = vmand %vm1665, %vm1099
    %vm2054 = vmand %vm1666, %vm1100
    %vm2055 = vmand %vm1667, %vm1101
    %vm2056 = vmand %vm1668, %vm1102
    %v2057 = vsel %vm2041, %v1084, 0.0
    %v2058 = vsel %vm2042, %v1083, 0.0
    %v2059 = vsel %vm2043, %v1082, 0.0
    %v2060 = vsel %vm2044, %v1081, 0.0
    %v2061 = vsel %vm2045, %v1080, 0.0
    %v2062 = vsel %vm2046, %v1079, 0.0
    %v2063 = vsel %vm2047, %v1078, 0.0
    %v2064 = vsel %vm2048, %v1077, 0.0
    %v2065 = vsel %vm2049, %v1076, 0.0
    %v2066 = vsel %vm2050, %v1075, 0.0
    %v2067 = vsel %vm2051, %v1074, 0.0
    %v2068 = vsel %vm2052, %v1073, 0.0
    %v2069 = vsel %vm2053, %v1072, 0.0
    %v2070 = vsel %vm2054, %v1071, 0.0
    %v2071 = vsel %vm2055, %v1086, 0.0
    %v2072 = vsel %vm2056, %v1085, 0.0
    %v2073 = vpack.c.bf16 %v2058, %v2057
    %v2074 = vpack.c.bf16 %v2060, %v2059
    %v2075 = vpack.c.bf16 %v2062, %v2061
    %v2076 = vpack.c.bf16 %v2064, %v2063
    %v2077 = vpack.c.bf16 %v2066, %v2065
    %v2078 = vpack.c.bf16 %v2068, %v2067
    %v2079 = vpack.c.bf16 %v2070, %v2069
    %v2080 = vpack.c.bf16 %v2072, %v2071
    %s2081 = scalar_lea.vmem [#allocation5], 128
    %v2082 = vld [vmem:[%s2081] sm:$0xf]
    %v2083 = vld [vmem:[%s2081 + $0x4] sm:$0xf]
    %v2084 = vld [vmem:[%s2081 + $0x8] sm:$0xf]
    %v2085 = vld [vmem:[%s2081 + $0xc] sm:$0xf]
    %v2090 = vunpack.c.l.b16 %v2082
    %v2091 = vunpack.c.l.b16 %v2083
    %v2092 = vunpack.c.l.b16 %v2084
    %v2093 = vunpack.c.l.b16 %v2085
    %v2094 = vpack.c.b16 %v2091, %v2090
    %v2095 = vpack.c.b16 %v2093, %v2092
    %v2099 = vsel %vm252, %v2073, 0
    %v2102 = vsel %vm252, %v2074, 0
    %v2105 = vsel %vm252, %v2075, 0
    %v2108 = vsel %vm252, %v2076, 0
    %v2111 = vsel %vm252, %v2077, 0
    %v2114 = vsel %vm252, %v2078, 0
    %v2117 = vsel %vm252, %v2079, 0
    %v2120 = vsel %vm252, %v2080, 0
    %2122 = vmatprep.subr.bf16.mxu0 0
    %2123 = vmatpush1.bf16.msra.mxu0 %v2094
    %2124 = vmatprep.subr.bf16.mxu0 0
    %2125 = vmatpush1.bf16.msra.mxu0 %v2095
    %2126 = vmatprep.subr.bf16.mxu0 0
    %2127 = vmatpush1.bf16.msra.mxu0 0
    %2128 = vmatprep.subr.bf16.mxu0 0
    %2129 = vmatpush1.bf16.msra.mxu0 0
    %2130 = vmatprep.subr.bf16.mxu0 0
    %2131 = vmatpush1.bf16.msra.mxu0 0
    %2132 = vmatprep.subr.bf16.mxu0 0
    %2133 = vmatpush1.bf16.msra.mxu0 0
    %2134 = vmatprep.subr.bf16.mxu0 0
    %2135 = vmatpush1.bf16.msra.mxu0 0
    %2136 = vmatprep.subr.bf16.mxu0 0
    %2137 = vmatpush1.bf16.msra.mxu0 0
    %2138 = vmatprep.subr.bf16.mxu0 0
    %2139 = vmatpush1.bf16.msra.mxu0 0
    %2140 = vmatprep.subr.bf16.mxu0 0
    %2141 = vmatpush1.bf16.msra.mxu0 0
    %2142 = vmatprep.subr.bf16.mxu0 0
    %2143 = vmatpush1.bf16.msra.mxu0 0
    %2144 = vmatprep.subr.bf16.mxu0 0
    %2145 = vmatpush1.bf16.msra.mxu0 0
    %2146 = vmatprep.subr.bf16.mxu0 0
    %2147 = vmatpush1.bf16.msra.mxu0 0
    %2148 = vmatprep.subr.bf16.mxu0 0
    %2149 = vmatpush1.bf16.msra.mxu0 0
    %2150 = vmatprep.subr.bf16.mxu0 0
    %2151 = vmatpush1.bf16.msra.mxu0 0
    %2152 = vmatprep.subr.bf16.mxu0 0
    %2153 = vmatpush1.bf16.msra.mxu0 0
    %2154 = vmatprep.mubr.bf16.mxu0 0
    %2155 = vmatmul.mubr.bf16.gmra.mrb[0].mxu0 %v2099
    %v2156 = vpop.f32.mrb[0].mxu0
    %v2157 = vadd.f32 0.0, %v2156
    %v2158 = vpop.f32.mrb[0].mxu0
    %v2159 = vpop.f32.mrb[0].mxu0
    %v2160 = vadd.f32 0.0, %v2159
    %v2161 = vpop.f32.mrb[0].mxu0
    %2162 = vmatprep.mubr.bf16.mxu0 0
    %2163 = vmatmul.mubr.bf16.gmra.mrb[0].mxu0 %v2102
    %v2164 = vpop.f32.mrb[0].mxu0
    %v2165 = vadd.f32 0.0, %v2164
    %v2166 = vpop.f32.mrb[0].mxu0
    %v2167 = vpop.f32.mrb[0].mxu0
    %v2168 = vadd.f32 0.0, %v2167
    %v2169 = vpop.f32.mrb[0].mxu0
    %2170 = vmatprep.mubr.bf16.mxu0 0
    %2171 = vmatmul.mubr.bf16.gmra.mrb[0].mxu0 %v2105
    %v2172 = vpop.f32.mrb[0].mxu0
    %v2173 = vadd.f32 0.0, %v2172
    %v2174 = vpop.f32.mrb[0].mxu0
    %v2175 = vpop.f32.mrb[0].mxu0
    %v2176 = vadd.f32 0.0, %v2175
    %v2177 = vpop.f32.mrb[0].mxu0
    %2178 = vmatprep.mubr.bf16.mxu0 0
    %2179 = vmatmul.mubr.bf16.gmra.mrb[0].mxu0 %v2108
    %v2180 = vpop.f32.mrb[0].mxu0
    %v2181 = vadd.f32 0.0, %v2180
    %v2182 = vpop.f32.mrb[0].mxu0
    %v2183 = vpop.f32.mrb[0].mxu0
    %v2184 = vadd.f32 0.0, %v2183
    %v2185 = vpop.f32.mrb[0].mxu0
    %2186 = vmatprep.mubr.bf16.mxu0 0
    %2187 = vmatmul.mubr.bf16.gmra.mrb[0].mxu0 %v2111
    %v2188 = vpop.f32.mrb[0].mxu0
    %v2189 = vadd.f32 0.0, %v2188
    %v2190 = vpop.f32.mrb[0].mxu0
    %v2191 = vpop.f32.mrb[0].mxu0
    %v2192 = vadd.f32 0.0, %v2191
    %v2193 = vpop.f32.mrb[0].mxu0
    %2194 = vmatprep.mubr.bf16.mxu0 0
    %2195 = vmatmul.mubr.bf16.gmra.mrb[0].mxu0 %v2114
    %v2196 = vpop.f32.mrb[0].mxu0
    %v2197 = vadd.f32 0.0, %v2196
    %v2198 = vpop.f32.mrb[0].mxu0
    %v2199 = vpop.f32.mrb[0].mxu0
    %v2200 = vadd.f32 0.0, %v2199
    %v2201 = vpop.f32.mrb[0].mxu0
    %2202 = vmatprep.mubr.bf16.mxu0 0
    %2203 = vmatmul.mubr.bf16.gmra.mrb[0].mxu0 %v2117
    %v2204 = vpop.f32.mrb[0].mxu0
    %v2205 = vadd.f32 0.0, %v2204
    %v2206 = vpop.f32.mrb[0].mxu0
    %v2207 = vpop.f32.mrb[0].mxu0
    %v2208 = vadd.f32 0.0, %v2207
    %v2209 = vpop.f32.mrb[0].mxu0
    %2210 = vmatprep.mubr.bf16.mxu0 0
    %2211 = vmatmul.mubr.bf16.gmra.mrb[0].mxu0 %v2120
    %v2212 = vpop.f32.mrb[0].mxu0
    %v2213 = vadd.f32 0.0, %v2212
    %v2214 = vpop.f32.mrb[0].mxu0
    %v2215 = vpop.f32.mrb[0].mxu0
    %v2216 = vadd.f32 0.0, %v2215
    %v2217 = vpop.f32.mrb[0].mxu0
    %2218 = vdwg.mxu0
    %v2219 = vadd.f32 %v2025, %v2157
    %v2220 = vadd.f32 %v2026, %v2160
    %v2221 = vadd.f32 %v2027, %v2165
    %v2222 = vadd.f32 %v2028, %v2168
    %v2223 = vadd.f32 %v2029, %v2173
    %v2224 = vadd.f32 %v2030, %v2176
    %v2225 = vadd.f32 %v2031, %v2181
    %v2226 = vadd.f32 %v2032, %v2184
    %v2227 = vadd.f32 %v2033, %v2189
    %v2228 = vadd.f32 %v2034, %v2192
    %v2229 = vadd.f32 %v2035, %v2197
    %v2230 = vadd.f32 %v2036, %v2200
    %v2231 = vadd.f32 %v2037, %v2205
    %v2232 = vadd.f32 %v2038, %v2208
    %v2233 = vadd.f32 %v2039, %v2213
    %v2234 = vadd.f32 %v2040, %v2216
    %v2235 = vld [vmem:[%s5] sm:$0x1]
    %v2236 = vld [vmem:[%s6] sm:$0x1]
    %v2237 = vsel %vm252, %v2219, 0.0
    %v2238 = vsel %vm252, %v2220, 0.0
    %v2239 = vadd.f32 %v2237, %v2238
    %v2240 = vsel %vm252, %v2221, 0.0
    %v2241 = vadd.f32 %v2239, %v2240
    %v2242 = vsel %vm252, %v2222, 0.0
    %v2243 = vadd.f32 %v2241, %v2242
    %v2244 = vsel %vm252, %v2223, 0.0
    %v2245 = vadd.f32 %v2243, %v2244
    %v2246 = vsel %vm252, %v2224, 0.0
    %v2247 = vadd.f32 %v2245, %v2246
    %v2248 = vsel %vm252, %v2225, 0.0
    %v2249 = vadd.f32 %v2247, %v2248
    %v2250 = vsel %vm252, %v2226, 0.0
    %v2251 = vadd.f32 %v2249, %v2250
    %v2252 = vsel %vm252, %v2227, 0.0
    %v2253 = vadd.f32 %v2251, %v2252
    %v2254 = vsel %vm252, %v2228, 0.0
    %v2255 = vadd.f32 %v2253, %v2254
    %v2256 = vsel %vm252, %v2229, 0.0
    %v2257 = vadd.f32 %v2255, %v2256
    %v2258 = vsel %vm252, %v2230, 0.0
    %v2259 = vadd.f32 %v2257, %v2258
    %v2260 = vsel %vm252, %v2231, 0.0
    %v2261 = vadd.f32 %v2259, %v2260
    %v2262 = vsel %vm252, %v2232, 0.0
    %v2263 = vadd.f32 %v2261, %v2262
    %v2264 = vsel %vm252, %v2233, 0.0
    %v2265 = vadd.f32 %v2263, %v2264
    %v2266 = vsel %vm252, %v2234, 0.0
    %v2267 = vadd.f32 %v2265, %v2266
    %v2268 = vrot.slane %v2267, 4
    %v2269 = vadd.f32 %v2267, %v2268
    %v2270 = vrot.slane %v2269, 2
    %v2271 = vadd.f32 %v2269, %v2270
    %v2272 = vrot.slane %v2271, 1
    %v2273 = vadd.f32 %v2271, %v2272
    %v2274 = vmul.f32 %v2273, 0.0078125
    %v2275 = vsub.f32 %v2219, %v2274
    %v2276 = vsub.f32 %v2220, %v2274
    %v2277 = vsub.f32 %v2221, %v2274
    %v2278 = vsub.f32 %v2222, %v2274
    %v2279 = vsub.f32 %v2223, %v2274
    %v2280 = vsub.f32 %v2224, %v2274
    %v2281 = vsub.f32 %v2225, %v2274
    %v2282 = vsub.f32 %v2226, %v2274
    %v2283 = vsub.f32 %v2227, %v2274
    %v2284 = vsub.f32 %v2228, %v2274
    %v2285 = vsub.f32 %v2229, %v2274
    %v2286 = vsub.f32 %v2230, %v2274
    %v2287 = vsub.f32 %v2231, %v2274
    %v2288 = vsub.f32 %v2232, %v2274
    %v2289 = vsub.f32 %v2233, %v2274
    %v2290 = vsub.f32 %v2234, %v2274
    %v2291 = vmul.f32 %v2275, %v2275
    %v2292 = vmul.f32 %v2276, %v2276
    %v2293 = vmul.f32 %v2277, %v2277
    %v2294 = vmul.f32 %v2278, %v2278
    %v2295 = vmul.f32 %v2279, %v2279
    %v2296 = vmul.f32 %v2280, %v2280
    %v2297 = vmul.f32 %v2281, %v2281
    %v2298 = vmul.f32 %v2282, %v2282
    %v2299 = vmul.f32 %v2283, %v2283
    %v2300 = vmul.f32 %v2284, %v2284
    %v2301 = vmul.f32 %v2285, %v2285
    %v2302 = vmul.f32 %v2286, %v2286
    %v2303 = vmul.f32 %v2287, %v2287
    %v2304 = vmul.f32 %v2288, %v2288
    %v2305 = vmul.f32 %v2289, %v2289
    %v2306 = vmul.f32 %v2290, %v2290
    %v2307 = vsel %vm252, %v2291, 0.0
    %v2308 = vsel %vm252, %v2292, 0.0
    %v2309 = vadd.f32 %v2307, %v2308
    %v2310 = vsel %vm252, %v2293, 0.0
    %v2311 = vadd.f32 %v2309, %v2310
    %v2312 = vsel %vm252, %v2294, 0.0
    %v2313 = vadd.f32 %v2311, %v2312
    %v2314 = vsel %vm252, %v2295, 0.0
    %v2315 = vadd.f32 %v2313, %v2314
    %v2316 = vsel %vm252, %v2296, 0.0
    %v2317 = vadd.f32 %v2315, %v2316
    %v2318 = vsel %vm252, %v2297, 0.0
    %v2319 = vadd.f32 %v2317, %v2318
    %v2320 = vsel %vm252, %v2298, 0.0
    %v2321 = vadd.f32 %v2319, %v2320
    %v2322 = vsel %vm252, %v2299, 0.0
    %v2323 = vadd.f32 %v2321, %v2322
    %v2324 = vsel %vm252, %v2300, 0.0
    %v2325 = vadd.f32 %v2323, %v2324
    %v2326 = vsel %vm252, %v2301, 0.0
    %v2327 = vadd.f32 %v2325, %v2326
    %v2328 = vsel %vm252, %v2302, 0.0
    %v2329 = vadd.f32 %v2327, %v2328
    %v2330 = vsel %vm252, %v2303, 0.0
    %v2331 = vadd.f32 %v2329, %v2330
    %v2332 = vsel %vm252, %v2304, 0.0
    %v2333 = vadd.f32 %v2331, %v2332
    %v2334 = vsel %vm252, %v2305, 0.0
    %v2335 = vadd.f32 %v2333, %v2334
    %v2336 = vsel %vm252, %v2306, 0.0
    %v2337 = vadd.f32 %v2335, %v2336
    %v2338 = vrot.slane %v2337, 4
    %v2339 = vadd.f32 %v2337, %v2338
    %v2340 = vrot.slane %v2339, 2
    %v2341 = vadd.f32 %v2339, %v2340
    %v2342 = vrot.slane %v2341, 1
    %v2343 = vadd.f32 %v2341, %v2342
    %v2344 = vmul.f32 %v2343, 0.0078125
    %v2345 = vadd.f32 %v2344, 1e-05
    %v2346 = vrsqrt.pop %v2345
    %v2347 = vmul.f32 %v2275, %v2346
    %v2348 = vmul.f32 %v2276, %v2346
    %v2349 = vmul.f32 %v2277, %v2346
    %v2350 = vmul.f32 %v2278, %v2346
    %v2351 = vmul.f32 %v2279, %v2346
    %v2352 = vmul.f32 %v2280, %v2346
    %v2353 = vmul.f32 %v2281, %v2346
    %v2354 = vmul.f32 %v2282, %v2346
    %v2355 = vmul.f32 %v2283, %v2346
    %v2356 = vmul.f32 %v2284, %v2346
    %v2357 = vmul.f32 %v2285, %v2346
    %v2358 = vmul.f32 %v2286, %v2346
    %v2359 = vmul.f32 %v2287, %v2346
    %v2360 = vmul.f32 %v2288, %v2346
    %v2361 = vmul.f32 %v2289, %v2346
    %v2362 = vmul.f32 %v2290, %v2346
    %v2364 = vlaneseq
    %v2365 = vshrl.u32 %v2364, 7
    %v2366 = vsub.s32 0, %v2365
    %v2367 = vrot.slane %v2235, %v2366
    %v2369 = vmul.f32 %v2347, %v2367
    %v2370 = vmul.f32 %v2348, %v2367
    %v2371 = vmul.f32 %v2349, %v2367
    %v2372 = vmul.f32 %v2350, %v2367
    %v2373 = vmul.f32 %v2351, %v2367
    %v2374 = vmul.f32 %v2352, %v2367
    %v2375 = vmul.f32 %v2353, %v2367
    %v2376 = vmul.f32 %v2354, %v2367
    %v2377 = vmul.f32 %v2355, %v2367
    %v2378 = vmul.f32 %v2356, %v2367
    %v2379 = vmul.f32 %v2357, %v2367
    %v2380 = vmul.f32 %v2358, %v2367
    %v2381 = vmul.f32 %v2359, %v2367
    %v2382 = vmul.f32 %v2360, %v2367
    %v2383 = vmul.f32 %v2361, %v2367
    %v2384 = vmul.f32 %v2362, %v2367
    %v2386 = vlaneseq
    %v2387 = vshrl.u32 %v2386, 7
    %v2388 = vsub.s32 0, %v2387
    %v2389 = vrot.slane %v2236, %v2388
    %v2391 = vadd.f32 %v2369, %v2389
    %v2392 = vadd.f32 %v2370, %v2389
    %v2393 = vadd.f32 %v2371, %v2389
    %v2394 = vadd.f32 %v2372, %v2389
    %v2395 = vadd.f32 %v2373, %v2389
    %v2396 = vadd.f32 %v2374, %v2389
    %v2397 = vadd.f32 %v2375, %v2389
    %v2398 = vadd.f32 %v2376, %v2389
    %v2399 = vadd.f32 %v2377, %v2389
    %v2400 = vadd.f32 %v2378, %v2389
    %v2401 = vadd.f32 %v2379, %v2389
    %v2402 = vadd.f32 %v2380, %v2389
    %v2403 = vadd.f32 %v2381, %v2389
    %v2404 = vadd.f32 %v2382, %v2389
    %v2405 = vadd.f32 %v2383, %v2389
    %v2406 = vadd.f32 %v2384, %v2389
    %v2407 = vmax.f32 %v2391, 0.0
    %v2408 = vmax.f32 %v2392, 0.0
    %v2409 = vmax.f32 %v2393, 0.0
    %v2410 = vmax.f32 %v2394, 0.0
    %v2411 = vmax.f32 %v2395, 0.0
    %v2412 = vmax.f32 %v2396, 0.0
    %v2413 = vmax.f32 %v2397, 0.0
    %v2414 = vmax.f32 %v2398, 0.0
    %v2415 = vmax.f32 %v2399, 0.0
    %v2416 = vmax.f32 %v2400, 0.0
    %v2417 = vmax.f32 %v2401, 0.0
    %v2418 = vmax.f32 %v2402, 0.0
    %v2419 = vmax.f32 %v2403, 0.0
    %v2420 = vmax.f32 %v2404, 0.0
    %v2421 = vmax.f32 %v2405, 0.0
    %v2422 = vmax.f32 %v2406, 0.0
    %v2423 = vpack.c.bf16 %v2408, %v2407
    %v2424 = vpack.c.bf16 %v2410, %v2409
    %v2425 = vpack.c.bf16 %v2412, %v2411
    %v2426 = vpack.c.bf16 %v2414, %v2413
    %v2427 = vpack.c.bf16 %v2416, %v2415
    %v2428 = vpack.c.bf16 %v2418, %v2417
    %v2429 = vpack.c.bf16 %v2420, %v2419
    %v2430 = vpack.c.bf16 %v2422, %v2421
    %v2431 = vld [vmem:[%s7] sm:$0xf]
    %v2432 = vld [vmem:[%s7 + $0x4] sm:$0xf]
    %v2433 = vld [vmem:[%s7 + $0x8] sm:$0xf]
    %v2434 = vld [vmem:[%s7 + $0xc] sm:$0xf]
    %v2439 = vunpack.c.l.b16 %v2431
    %v2440 = vunpack.c.l.b16 %v2432
    %v2441 = vunpack.c.l.b16 %v2433
    %v2442 = vunpack.c.l.b16 %v2434
    %v2443 = vpack.c.b16 %v2440, %v2439
    %v2444 = vpack.c.b16 %v2442, %v2441
    %v2448 = vsel %vm252, %v2423, 0
    %v2451 = vsel %vm252, %v2424, 0
    %v2454 = vsel %vm252, %v2425, 0
    %v2457 = vsel %vm252, %v2426, 0
    %v2460 = vsel %vm252, %v2427, 0
    %v2463 = vsel %vm252, %v2428, 0
    %v2466 = vsel %vm252, %v2429, 0
    %v2469 = vsel %vm252, %v2430, 0
    %2471 = vmatprep.subr.bf16.mxu0 0
    %2472 = vmatpush1.bf16.msra.mxu0 %v2443
    %2473 = vmatprep.subr.bf16.mxu0 0
    %2474 = vmatpush1.bf16.msra.mxu0 %v2444
    %2475 = vmatprep.subr.bf16.mxu0 0
    %2476 = vmatpush1.bf16.msra.mxu0 0
    %2477 = vmatprep.subr.bf16.mxu0 0
    %2478 = vmatpush1.bf16.msra.mxu0 0
    %2479 = vmatprep.subr.bf16.mxu0 0
    %2480 = vmatpush1.bf16.msra.mxu0 0
    %2481 = vmatprep.subr.bf16.mxu0 0
    %2482 = vmatpush1.bf16.msra.mxu0 0
    %2483 = vmatprep.subr.bf16.mxu0 0
    %2484 = vmatpush1.bf16.msra.mxu0 0
    %2485 = vmatprep.subr.bf16.mxu0 0
    %2486 = vmatpush1.bf16.msra.mxu0 0
    %2487 = vmatprep.subr.bf16.mxu0 0
    %2488 = vmatpush1.bf16.msra.mxu0 0
    %2489 = vmatprep.subr.bf16.mxu0 0
    %2490 = vmatpush1.bf16.msra.mxu0 0
    %2491 = vmatprep.subr.bf16.mxu0 0
    %2492 = vmatpush1.bf16.msra.mxu0 0
    %2493 = vmatprep.subr.bf16.mxu0 0
    %2494 = vmatpush1.bf16.msra.mxu0 0
    %2495 = vmatprep.subr.bf16.mxu0 0
    %2496 = vmatpush1.bf16.msra.mxu0 0
    %2497 = vmatprep.subr.bf16.mxu0 0
    %2498 = vmatpush1.bf16.msra.mxu0 0
    %2499 = vmatprep.subr.bf16.mxu0 0
    %2500 = vmatpush1.bf16.msra.mxu0 0
    %2501 = vmatprep.subr.bf16.mxu0 0
    %2502 = vmatpush1.bf16.msra.mxu0 0
    %2503 = vmatprep.mubr.bf16.mxu0 0
    %2504 = vmatmul.mubr.bf16.gmra.mrb[0].mxu0 %v2448
    %v2505 = vpop.f32.mrb[0].mxu0
    %v2506 = vadd.f32 0.0, %v2505
    %v2507 = vpop.f32.mrb[0].mxu0
    %v2508 = vpop.f32.mrb[0].mxu0
    %v2509 = vadd.f32 0.0, %v2508
    %v2510 = vpop.f32.mrb[0].mxu0
    %2511 = vmatprep.mubr.bf16.mxu0 0
    %2512 = vmatmul.mubr.bf16.gmra.mrb[0].mxu0 %v2451
    %v2513 = vpop.f32.mrb[0].mxu0
    %v2514 = vadd.f32 0.0, %v2513
    %v2515 = vpop.f32.mrb[0].mxu0
    %v2516 = vpop.f32.mrb[0].mxu0
    %v2517 = vadd.f32 0.0, %v2516
    %v2518 = vpop.f32.mrb[0].mxu0
    %2519 = vmatprep.mubr.bf16.mxu0 0
    %2520 = vmatmul.mubr.bf16.gmra.mrb[0].mxu0 %v2454
    %v2521 = vpop.f32.mrb[0].mxu0
    %v2522 = vadd.f32 0.0, %v2521
    %v2523 = vpop.f32.mrb[0].mxu0
    %v2524 = vpop.f32.mrb[0].mxu0
    %v2525 = vadd.f32 0.0, %v2524
    %v2526 = vpop.f32.mrb[0].mxu0
    %2527 = vmatprep.mubr.bf16.mxu0 0
    %2528 = vmatmul.mubr.bf16.gmra.mrb[0].mxu0 %v2457
    %v2529 = vpop.f32.mrb[0].mxu0
    %v2530 = vadd.f32 0.0, %v2529
    %v2531 = vpop.f32.mrb[0].mxu0
    %v2532 = vpop.f32.mrb[0].mxu0
    %v2533 = vadd.f32 0.0, %v2532
    %v2534 = vpop.f32.mrb[0].mxu0
    %2535 = vmatprep.mubr.bf16.mxu0 0
    %2536 = vmatmul.mubr.bf16.gmra.mrb[0].mxu0 %v2460
    %v2537 = vpop.f32.mrb[0].mxu0
    %v2538 = vadd.f32 0.0, %v2537
    %v2539 = vpop.f32.mrb[0].mxu0
    %v2540 = vpop.f32.mrb[0].mxu0
    %v2541 = vadd.f32 0.0, %v2540
    %v2542 = vpop.f32.mrb[0].mxu0
    %2543 = vmatprep.mubr.bf16.mxu0 0
    %2544 = vmatmul.mubr.bf16.gmra.mrb[0].mxu0 %v2463
    %v2545 = vpop.f32.mrb[0].mxu0
    %v2546 = vadd.f32 0.0, %v2545
    %v2547 = vpop.f32.mrb[0].mxu0
    %v2548 = vpop.f32.mrb[0].mxu0
    %v2549 = vadd.f32 0.0, %v2548
    %v2550 = vpop.f32.mrb[0].mxu0
    %2551 = vmatprep.mubr.bf16.mxu0 0
    %2552 = vmatmul.mubr.bf16.gmra.mrb[0].mxu0 %v2466
    %v2553 = vpop.f32.mrb[0].mxu0
    %v2554 = vadd.f32 0.0, %v2553
    %v2555 = vpop.f32.mrb[0].mxu0
    %v2556 = vpop.f32.mrb[0].mxu0
    %v2557 = vadd.f32 0.0, %v2556
    %v2558 = vpop.f32.mrb[0].mxu0
    %2559 = vmatprep.mubr.bf16.mxu0 0
    %2560 = vmatmul.mubr.bf16.gmra.mrb[0].mxu0 %v2469
    %v2561 = vpop.f32.mrb[0].mxu0
    %v2562 = vadd.f32 0.0, %v2561
    %v2563 = vpop.f32.mrb[0].mxu0
    %v2564 = vpop.f32.mrb[0].mxu0
    %v2565 = vadd.f32 0.0, %v2564
    %v2566 = vpop.f32.mrb[0].mxu0
    %2567 = vdwg.mxu0
    %v2568 = vld [vmem:[%s8] sm:$0x1]
    %v2569 = vld [vmem:[%s9] sm:$0x1]
    %v2570 = vadd.f32 %v2506, %v2509
    %v2571 = vadd.f32 %v2570, %v2514
    %v2572 = vadd.f32 %v2571, %v2517
    %v2573 = vadd.f32 %v2572, %v2522
    %v2574 = vadd.f32 %v2573, %v2525
    %v2575 = vadd.f32 %v2574, %v2530
    %v2576 = vadd.f32 %v2575, %v2533
    %v2577 = vadd.f32 %v2576, %v2538
    %v2578 = vadd.f32 %v2577, %v2541
    %v2579 = vadd.f32 %v2578, %v2546
    %v2580 = vadd.f32 %v2579, %v2549
    %v2581 = vadd.f32 %v2580, %v2554
    %v2582 = vadd.f32 %v2581, %v2557
    %v2583 = vadd.f32 %v2582, %v2562
    %v2584 = vadd.f32 %v2583, %v2565
    %v2585 = vrot.slane %v2584, 4
    %v2586 = vadd.f32 %v2584, %v2585
    %v2587 = vrot.slane %v2586, 2
    %v2588 = vadd.f32 %v2586, %v2587
    %v2589 = vrot.slane %v2588, 1
    %v2590 = vadd.f32 %v2588, %v2589
    %v2591 = vmul.f32 %v2590, 0.0078125
    %v2592 = vsub.f32 %v2506, %v2591
    %v2593 = vsub.f32 %v2509, %v2591
    %v2594 = vsub.f32 %v2514, %v2591
    %v2595 = vsub.f32 %v2517, %v2591
    %v2596 = vsub.f32 %v2522, %v2591
    %v2597 = vsub.f32 %v2525, %v2591
    %v2598 = vsub.f32 %v2530, %v2591
    %v2599 = vsub.f32 %v2533, %v2591
    %v2600 = vsub.f32 %v2538, %v2591
    %v2601 = vsub.f32 %v2541, %v2591
    %v2602 = vsub.f32 %v2546, %v2591
    %v2603 = vsub.f32 %v2549, %v2591
    %v2604 = vsub.f32 %v2554, %v2591
    %v2605 = vsub.f32 %v2557, %v2591
    %v2606 = vsub.f32 %v2562, %v2591
    %v2607 = vsub.f32 %v2565, %v2591
    %v2608 = vmul.f32 %v2592, %v2592
    %v2609 = vmul.f32 %v2593, %v2593
    %v2610 = vmul.f32 %v2594, %v2594
    %v2611 = vmul.f32 %v2595, %v2595
    %v2612 = vmul.f32 %v2596, %v2596
    %v2613 = vmul.f32 %v2597, %v2597
    %v2614 = vmul.f32 %v2598, %v2598
    %v2615 = vmul.f32 %v2599, %v2599
    %v2616 = vmul.f32 %v2600, %v2600
    %v2617 = vmul.f32 %v2601, %v2601
    %v2618 = vmul.f32 %v2602, %v2602
    %v2619 = vmul.f32 %v2603, %v2603
    %v2620 = vmul.f32 %v2604, %v2604
    %v2621 = vmul.f32 %v2605, %v2605
    %v2622 = vmul.f32 %v2606, %v2606
    %v2623 = vmul.f32 %v2607, %v2607
    %v2624 = vadd.f32 %v2608, %v2609
    %v2625 = vadd.f32 %v2624, %v2610
    %v2626 = vadd.f32 %v2625, %v2611
    %v2627 = vadd.f32 %v2626, %v2612
    %v2628 = vadd.f32 %v2627, %v2613
    %v2629 = vadd.f32 %v2628, %v2614
    %v2630 = vadd.f32 %v2629, %v2615
    %v2631 = vadd.f32 %v2630, %v2616
    %v2632 = vadd.f32 %v2631, %v2617
    %v2633 = vadd.f32 %v2632, %v2618
    %v2634 = vadd.f32 %v2633, %v2619
    %v2635 = vadd.f32 %v2634, %v2620
    %v2636 = vadd.f32 %v2635, %v2621
    %v2637 = vadd.f32 %v2636, %v2622
    %v2638 = vadd.f32 %v2637, %v2623
    %v2639 = vrot.slane %v2638, 4
    %v2640 = vadd.f32 %v2638, %v2639
    %v2641 = vrot.slane %v2640, 2
    %v2642 = vadd.f32 %v2640, %v2641
    %v2643 = vrot.slane %v2642, 1
    %v2644 = vadd.f32 %v2642, %v2643
    %v2645 = vmul.f32 %v2644, 0.0078125
    %v2646 = vadd.f32 %v2645, 1e-05
    %v2647 = vrsqrt.pop %v2646
    %v2648 = vmul.f32 %v2592, %v2647
    %v2649 = vmul.f32 %v2593, %v2647
    %v2650 = vmul.f32 %v2594, %v2647
    %v2651 = vmul.f32 %v2595, %v2647
    %v2652 = vmul.f32 %v2596, %v2647
    %v2653 = vmul.f32 %v2597, %v2647
    %v2654 = vmul.f32 %v2598, %v2647
    %v2655 = vmul.f32 %v2599, %v2647
    %v2656 = vmul.f32 %v2600, %v2647
    %v2657 = vmul.f32 %v2601, %v2647
    %v2658 = vmul.f32 %v2602, %v2647
    %v2659 = vmul.f32 %v2603, %v2647
    %v2660 = vmul.f32 %v2604, %v2647
    %v2661 = vmul.f32 %v2605, %v2647
    %v2662 = vmul.f32 %v2606, %v2647
    %v2663 = vmul.f32 %v2607, %v2647
    %v2665 = vlaneseq
    %v2666 = vshrl.u32 %v2665, 7
    %v2667 = vsub.s32 0, %v2666
    %v2668 = vrot.slane %v2568, %v2667
    %v2670 = vmul.f32 %v2648, %v2668
    %v2671 = vmul.f32 %v2649, %v2668
    %v2672 = vmul.f32 %v2650, %v2668
    %v2673 = vmul.f32 %v2651, %v2668
    %v2674 = vmul.f32 %v2652, %v2668
    %v2675 = vmul.f32 %v2653, %v2668
    %v2676 = vmul.f32 %v2654, %v2668
    %v2677 = vmul.f32 %v2655, %v2668
    %v2678 = vmul.f32 %v2656, %v2668
    %v2679 = vmul.f32 %v2657, %v2668
    %v2680 = vmul.f32 %v2658, %v2668
    %v2681 = vmul.f32 %v2659, %v2668
    %v2682 = vmul.f32 %v2660, %v2668
    %v2683 = vmul.f32 %v2661, %v2668
    %v2684 = vmul.f32 %v2662, %v2668
    %v2685 = vmul.f32 %v2663, %v2668
    %v2687 = vlaneseq
    %v2688 = vshrl.u32 %v2687, 7
    %v2689 = vsub.s32 0, %v2688
    %v2690 = vrot.slane %v2569, %v2689
    %v2692 = vadd.f32 %v2670, %v2690
    %v2693 = vadd.f32 %v2671, %v2690
    %v2694 = vadd.f32 %v2672, %v2690
    %v2695 = vadd.f32 %v2673, %v2690
    %v2696 = vadd.f32 %v2674, %v2690
    %v2697 = vadd.f32 %v2675, %v2690
    %v2698 = vadd.f32 %v2676, %v2690
    %v2699 = vadd.f32 %v2677, %v2690
    %v2700 = vadd.f32 %v2678, %v2690
    %v2701 = vadd.f32 %v2679, %v2690
    %v2702 = vadd.f32 %v2680, %v2690
    %v2703 = vadd.f32 %v2681, %v2690
    %v2704 = vadd.f32 %v2682, %v2690
    %v2705 = vadd.f32 %v2683, %v2690
    %v2706 = vadd.f32 %v2684, %v2690
    %v2707 = vadd.f32 %v2685, %v2690
    %v2708 = vadd.f32 %v2692, %v65
    %v2709 = vadd.f32 %v2693, %v66
    %v2710 = vadd.f32 %v2694, %v67
    %v2711 = vadd.f32 %v2695, %v68
    %v2712 = vadd.f32 %v2696, %v69
    %v2713 = vadd.f32 %v2697, %v70
    %v2714 = vadd.f32 %v2698, %v71
    %v2715 = vadd.f32 %v2699, %v72
    %v2716 = vadd.f32 %v2700, %v73
    %v2717 = vadd.f32 %v2701, %v74
    %v2718 = vadd.f32 %v2702, %v75
    %v2719 = vadd.f32 %v2703, %v76
    %v2720 = vadd.f32 %v2704, %v77
    %v2721 = vadd.f32 %v2705, %v78
    %v2722 = vadd.f32 %v2706, %v79
    %v2723 = vadd.f32 %v2707, %v80
    %v2724 = vmax.f32 %v2708, 0.0
    %v2725 = vmax.f32 %v2709, 0.0
    %v2726 = vmax.f32 %v2710, 0.0
    %v2727 = vmax.f32 %v2711, 0.0
    %v2728 = vmax.f32 %v2712, 0.0
    %v2729 = vmax.f32 %v2713, 0.0
    %v2730 = vmax.f32 %v2714, 0.0
    %v2731 = vmax.f32 %v2715, 0.0
    %v2732 = vmax.f32 %v2716, 0.0
    %v2733 = vmax.f32 %v2717, 0.0
    %v2734 = vmax.f32 %v2718, 0.0
    %v2735 = vmax.f32 %v2719, 0.0
    %v2736 = vmax.f32 %v2720, 0.0
    %v2737 = vmax.f32 %v2721, 0.0
    %v2738 = vmax.f32 %v2722, 0.0
    %v2739 = vmax.f32 %v2723, 0.0
    %2740 = vst [vmem:[#allocation7] sm:$0xff] %v2724
    %2741 = vst [vmem:[#allocation7 + $0x8] sm:$0xff] %v2725
    %2742 = vst [vmem:[#allocation7 + $0x10] sm:$0xff] %v2726
    %2743 = vst [vmem:[#allocation7 + $0x18] sm:$0xff] %v2727
    %2744 = vst [vmem:[#allocation7 + $0x20] sm:$0xff] %v2728
    %2745 = vst [vmem:[#allocation7 + $0x28] sm:$0xff] %v2729
    %2746 = vst [vmem:[#allocation7 + $0x30] sm:$0xff] %v2730
    %2747 = vst [vmem:[#allocation7 + $0x38] sm:$0xff] %v2731
    %2748 = vst [vmem:[#allocation7 + $0x40] sm:$0xff] %v2732
    %2749 = vst [vmem:[#allocation7 + $0x48] sm:$0xff] %v2733
    %2750 = vst [vmem:[#allocation7 + $0x50] sm:$0xff] %v2734
    %2751 = vst [vmem:[#allocation7 + $0x58] sm:$0xff] %v2735
    %2752 = vst [vmem:[#allocation7 + $0x60] sm:$0xff] %v2736
    %2753 = vst [vmem:[#allocation7 + $0x68] sm:$0xff] %v2737
    %2754 = vst [vmem:[#allocation7 + $0x70] sm:$0xff] %v2738
    %2755 = vst [vmem:[#allocation7 + $0x78] sm:$0xff] %v2739
    // Predicated region
    $region50: #{bottleneck_forward_nhwc.1} parent=1 // pred_check
      _
    $region51: #{bottleneck_forward_nhwc.1} parent=1 // pred_check_branch
      %2757 = sbr.rel (0) target = $region53
    $region52: #{bottleneck_forward_nhwc.1} parent=1 // pred_region
      %s2759 = ssub.s32 2048, 2048
      %2760 = vsyncadd [#allocation4], %s2759
      %s2761 = sshll.u32 [#allocation7], 4
      %s2762 = int_to_ptr.vmem [resolvable:$true] %s2761
      %2767 = dma.vmem_to_hbm [thread:$0]  %s2762, 2048, %s10, [#allocation4], 128, 128, 8
    $region53: #{bottleneck_forward_nhwc.1} parent=1 // pred_fallthru
      _
    // Predicated region
    $region54: #{bottleneck_forward_nhwc.1} parent=1 // pred_check
      _
    $region55: #{bottleneck_forward_nhwc.1} parent=1 // pred_check_branch
      %2769 = sbr.rel (0) target = $region57
    $region56: #{bottleneck_forward_nhwc.1} parent=1 // pred_region
      %2770 = dma.done [#allocation4], 2048
    $region57: #{bottleneck_forward_nhwc.1} parent=1 // pred_fallthru
      _
    %2771 = vsyncpa [#allocation3], 1
    %2772 = vsyncpa [#allocation6], 1
    %2773 = vsyncpa [#allocation4], 1

</llo_original>
